<compile_context>
chip_gen: v6e
topology: v6e:2x2x1
jax: 0.10.0
libtpu: 0.0.40
codegen_flags: <defaults>
</compile_context>

<pallas_src>
import functools

import jax
import jax.numpy as jnp
from jax.experimental import pallas as pl
from jax.experimental.pallas import tpu as pltpu

_VMEM_LIMIT = 48 * 1024 * 1024  # safe on v5e/v6e (128 MiB) and v7x (64 MiB)


def _round_up(x, m):
    return (x + m - 1) // m * m


def _pick_tile(total, target, quantum):
    """Largest divisor of `total` that is <= target and a multiple of
    `quantum` (or equal to `total`).  Falls back to a single full block."""
    for t in range(min(total, target), 0, -1):
        if total % t == 0 and (t % quantum == 0 or t == total):
            return t
    return total


# ----------------------------------------------------------------------------
# Kernel 1: conv-as-matmul tile + per-image BN sum / sumsq accumulation.
#   grid = (N, P // TP)   --  ("parallel", "arbitrary")
# ----------------------------------------------------------------------------
def conv_stats_kernel(p_ref, w_ref, y_ref, st_ref):
    t = pl.program_id(1)
    # (TP, 64) @ (64, 64) on the MXU (taps zero-padded 49 -> 64).
    y = jnp.dot(p_ref[0], w_ref[...], preferred_element_type=jnp.float32)
    y_ref[0] = y

    @pl.when(t == 0)
    def _init():
        st_ref[...] = jnp.zeros_like(st_ref)

    s = jnp.sum(y, axis=0, keepdims=True)        # (1, 64) per-channel sum
    ss = jnp.sum(y * y, axis=0, keepdims=True)   # (1, 64) per-channel sumsq
    st_ref[0] = st_ref[0] + jnp.concatenate([s, ss], axis=0)


# ----------------------------------------------------------------------------
# Kernel 2: BN-affine + ReLU + fc1 (K-tiled accumulate) + softplus
#           + fused (fc21 || fc22) with exp on the sigma half.
#   grid = (Npad // TN, LLD // TK)  --  ("parallel", "arbitrary")
# ----------------------------------------------------------------------------
def vae_head_kernel(z_dim, f_ref, sc_ref, sh_ref, w1_ref, b1_ref, w2_ref,
                    b2_ref, o_ref, acc_ref):
    k = pl.program_id(1)

    @pl.when(k == 0)
    def _init():
        acc_ref[...] = jnp.zeros_like(acc_ref)

    # BatchNorm (precomputed per-column scale/shift) + ReLU, fused into fc1.
    a = jnp.maximum(f_ref[...] * sc_ref[...] + sh_ref[...], 0.0)
    acc_ref[...] += jnp.dot(a, w1_ref[...], preferred_element_type=jnp.float32)

    @pl.when(k == pl.num_programs(1) - 1)
    def _finalize():
        h = jnp.logaddexp(acc_ref[...] + b1_ref[...], 0.0)        # softplus
        z = jnp.dot(h, w2_ref[...], preferred_element_type=jnp.float32)
        z = z + b2_ref[...]
        col = jax.lax.broadcasted_iota(jnp.int32, z.shape, 1)
        is_mu = col < z_dim
        # columns [0, Z) -> mu, columns [Z, 2Z) -> exp (padding cols discarded)
        o_ref[...] = jnp.where(is_mu, z, jnp.exp(jnp.where(is_mu, 0.0, z)))


def _im2col(x, OH, OW):
    """x: (N, 1, H, W) -> patches (N, OH*OW, 64) [taps zero-padded 49->64]."""
    N = x.shape[0]
    xp = jnp.pad(x[:, 0], ((0, 0), (3, 3), (3, 3)))
    cols = []
    for kh in range(7):
        for kw in range(7):
            cols.append(xp[:, kh:kh + 2 * OH:2, kw:kw + 2 * OW:2])  # (N,OH,OW)
    patches = jnp.stack(cols, axis=-1).reshape(N, OH * OW, 49)
    return jnp.pad(patches, ((0, 0), (0, 0), (0, 64 - 49)))


@jax.jit
def encoder_forward(x, params):
    """x: (N, 1, H, W) float32 (NCHW, like PyTorch). Returns (z_mu, z_sigma)."""
    N, _, H, W = x.shape
    OH, OW = H // 2, W // 2
    P = OH * OW
    LLD = P * 64
    Hd = params["w1"].shape[1]
    Z = params["w21"].shape[1]

    # ---------------- stage 1: conv + BN statistics ----------------
    patches = _im2col(x, OH, OW)                             # (N, P, 64)
    w_mat = jnp.pad(params["w_conv"].reshape(64, 49).T,      # (49,64)->(64,64)
                    ((0, 64 - 49), (0, 0)))

    TP = _pick_tile(P, 512, 8)
    conv_raw, stats = pl.pallas_call(
        conv_stats_kernel,
        out_shape=(jax.ShapeDtypeStruct((N, P, 64), jnp.float32),
                   jax.ShapeDtypeStruct((N, 2, 64), jnp.float32)),
        grid=(N, P // TP),
        in_specs=[
            pl.BlockSpec((1, TP, 64), lambda n, t: (n, t, 0)),
            pl.BlockSpec((64, 64), lambda n, t: (0, 0)),
        ],
        out_specs=(
            pl.BlockSpec((1, TP, 64), lambda n, t: (n, t, 0)),
            pl.BlockSpec((1, 2, 64), lambda n, t: (n, 0, 0)),
        ),
        compiler_params=pltpu.CompilerParams(
            dimension_semantics=("parallel", "arbitrary"),
            vmem_limit_bytes=_VMEM_LIMIT),
    )(patches, w_mat)

    # finalize BN batch statistics (tiny XLA ops on (2,64))
    cnt = jnp.float32(N * P)
    tot = jnp.sum(stats, axis=0)                      # (2, 64)
    mean = tot[0] / cnt
    var = tot[1] / cnt - mean * mean                  # biased var (PyTorch BN)
    scale = params["bn_gamma"] * jax.lax.rsqrt(var + 1e-5)
    shift = params["bn_beta"] - mean * scale

    # ---------------- stage 2: BN-affine + ReLU + MLP head ----------------
    Npad = _round_up(max(N, 8), 8)
    Hdp = _round_up(Hd, 128)
    Z2p = _round_up(2 * Z, 128)
    TK = _pick_tile(LLD, 2048, 128)
    TN = _pick_tile(Npad, 256, 8)

    # features stay in (oh, ow, c) order -> NO activation transpose
    feat = jnp.pad(conv_raw.reshape(N, LLD), ((0, Npad - N), (0, 0)))
    scale_full = jnp.tile(scale, P).reshape(1, LLD)
    shift_full = jnp.tile(shift, P).reshape(1, LLD)

    # fold the (c, p) -> (p, c) flatten permutation into the fc1 weight rows
    w1p = params["w1"].reshape(64, P, Hd).transpose(1, 0, 2).reshape(LLD, Hd)
    w1p = jnp.pad(w1p, ((0, 0), (0, Hdp - Hd)))
    b1p = jnp.pad(params["b1"], (0, Hdp - Hd)).reshape(1, Hdp)

    # fuse fc21 || fc22 into one lane-dense matmul
    w2p = jnp.pad(jnp.concatenate([params["w21"], params["w22"]], axis=1),
                  ((0, Hdp - Hd), (0, Z2p - 2 * Z)))
    b2p = jnp.pad(jnp.concatenate([params["b21"], params["b22"]]),
                  (0, Z2p - 2 * Z)).reshape(1, Z2p)

    out = pl.pallas_call(
        functools.partial(vae_head_kernel, Z),
        out_shape=jax.ShapeDtypeStruct((Npad, Z2p), jnp.float32),
        grid=(Npad // TN, LLD // TK),
        in_specs=[
            pl.BlockSpec((TN, TK), lambda i, k: (i, k)),
            pl.BlockSpec((1, TK), lambda i, k: (0, k)),
            pl.BlockSpec((1, TK), lambda i, k: (0, k)),
            pl.BlockSpec((TK, Hdp), lambda i, k: (k, 0)),
            pl.BlockSpec((1, Hdp), lambda i, k: (0, 0)),
            pl.BlockSpec((Hdp, Z2p), lambda i, k: (0, 0)),
            pl.BlockSpec((1, Z2p), lambda i, k: (0, 0)),
        ],
        out_specs=pl.BlockSpec((TN, Z2p), lambda i, k: (i, 0)),
        scratch_shapes=[pltpu.VMEM((TN, Hdp), jnp.float32)],
        compiler_params=pltpu.CompilerParams(
            dimension_semantics=("parallel", "arbitrary"),
            vmem_limit_bytes=_VMEM_LIMIT),
    )(feat, scale_full, shift_full, w1p, b1p, w2p, b2p)

    return out[:N, :Z], out[:N, Z:2 * Z]


def reference_forward(x, params):
    """Pure-JAX reference (uses lax.conv) for correctness check."""
    y = jax.lax.conv_general_dilated(
        x, params["w_conv"], window_strides=(2, 2),
        padding=((3, 3), (3, 3)),
        dimension_numbers=("NCHW", "OIHW", "NCHW"))
    mean = jnp.mean(y, axis=(0, 2, 3), keepdims=True)
    var = jnp.mean((y - mean) ** 2, axis=(0, 2, 3), keepdims=True)
    y = (y - mean) * jax.lax.rsqrt(var + 1e-5)
    y = y * params["bn_gamma"].reshape(1, 64, 1, 1) \
        + params["bn_beta"].reshape(1, 64, 1, 1)
    y = jnp.maximum(y, 0.0)
    feat = y.reshape(x.shape[0], -1)
    h = jax.nn.softplus(feat @ params["w1"] + params["b1"])
    mu = h @ params["w21"] + params["b21"]
    sigma = jnp.exp(h @ params["w22"] + params["b22"])
    return mu, sigma


def init_params(key, input_dim, hidden_dim, z_dim):
    dim = input_dim // 2
    lld = 64 * dim * dim
    ks = jax.random.split(key, 8)

    def unif(k, shape, fan_in):
        bound = 1.0 / jnp.sqrt(fan_in)
        return jax.random.uniform(k, shape, jnp.float32, -bound, bound)

    return {
        "w_conv": unif(ks[0], (64, 1, 7, 7), 1 * 7 * 7),
        "bn_gamma": jnp.ones((64,), jnp.float32),
        "bn_beta": jnp.zeros((64,), jnp.float32),
        "w1": unif(ks[1], (lld, hidden_dim), lld),
        "b1": unif(ks[2], (hidden_dim,), lld),
        "w21": unif(ks[3], (hidden_dim, z_dim), hidden_dim),
        "b21": unif(ks[4], (z_dim,), hidden_dim),
        "w22": unif(ks[5], (hidden_dim, z_dim), hidden_dim),
        "b22": unif(ks[6], (z_dim,), hidden_dim),
    }


if __name__ == "__main__":
    # small shapes: batch=2, 1 channel, 16x16 image -> input_dim=16,
    # hidden_dim=32, z_dim=16 (stand-ins for ConfigNetwork values)
    N, INPUT_DIM, HIDDEN_DIM, Z_DIM = 2, 16, 32, 16

    key = jax.random.PRNGKey(0)
    kx, kp = jax.random.split(key)
    x = jax.random.normal(kx, (N, 1, INPUT_DIM, INPUT_DIM), jnp.float32)
    params = init_params(kp, INPUT_DIM, HIDDEN_DIM, Z_DIM)

    z_mu, z_sigma = encoder_forward(x, params)
    jax.block_until_ready((z_mu, z_sigma))

    ref_mu, ref_sigma = reference_forward(x, params)
    assert z_mu.shape == (N, Z_DIM) and z_sigma.shape == (N, Z_DIM)
    assert jnp.allclose(z_mu, ref_mu, rtol=1e-3, atol=1e-3)
    assert jnp.allclose(z_sigma, ref_sigma, rtol=1e-3, atol=1e-3)

    print("KERNEL_OK")
</pallas_src>

<mosaic_0001>
module attributes {stable_mosaic.version = 11 : i64} {
  func.func @conv_stats_kernel(%arg0: i32, %arg1: i32, %arg2: memref<1x64x64xf32, #tpu.memory_space<vmem>>, %arg3: memref<64x64xf32, #tpu.memory_space<vmem>>, %arg4: memref<1x64x64xf32, #tpu.memory_space<vmem>>, %arg5: memref<1x2x64xf32, #tpu.memory_space<vmem>>) attributes {dimension_semantics = [#tpu.dimension_semantics<parallel>, #tpu.dimension_semantics<arbitrary>], iteration_bounds = array<i64: 2, 1>, scalar_prefetch = 0 : i64, scratch_operands = 0 : i64, tpu.core_type = #tpu.core_type<tc>, window_params = [{transform_indices = @transform_0, window_bounds = array<i64: 1, 64, 64>}, {pipeline_mode = #tpu.pipeline_mode<synchronous>, transform_indices = @transform_1, window_bounds = array<i64: 64, 64>}, {transform_indices = @transform_2, window_bounds = array<i64: 1, 64, 64>}, {transform_indices = @transform_3, window_bounds = array<i64: 1, 2, 64>}]} {
    %c0 = arith.constant 0 : index
    %c0_0 = arith.constant 0 : index
    %c0_1 = arith.constant 0 : index
    %0 = vector.load %arg2[%c0, %c0_0, %c0_1] : memref<1x64x64xf32, #tpu.memory_space<vmem>>, vector<1x64x64xf32>
    %1 = vector.shape_cast %0 : vector<1x64x64xf32> to vector<64x64xf32>
    %c0_2 = arith.constant 0 : index
    %c0_3 = arith.constant 0 : index
    %2 = vector.load %arg3[%c0_2, %c0_3] : memref<64x64xf32, #tpu.memory_space<vmem>>, vector<64x64xf32>
    %cst = arith.constant dense<0.000000e+00> : vector<64x64xf32>
    %3 = tpu.matmul %1, %2, %cst {dimension_numbers = #tpu.dot_dimension_numbers<[1], [0], [0], [1], [0, 0, 1, 1], [], []>} : vector<64x64xf32>, vector<64x64xf32>, vector<64x64xf32> -> vector<64x64xf32>
    %c0_4 = arith.constant 0 : index
    %c0_5 = arith.constant 0 : index
    %c0_6 = arith.constant 0 : index
    %4 = vector.load %arg4[%c0_4, %c0_5, %c0_6] : memref<1x64x64xf32, #tpu.memory_space<vmem>>, vector<1x64x64xf32>
    %5 = vector.shape_cast %4 : vector<1x64x64xf32> to vector<64x64xf32>
    %6 = vector.shape_cast %3 : vector<64x64xf32> to vector<1x64x64xf32>
    tpu.vector_store %arg4[%c0_4, %c0_5, %c0_6], %6 {strides = array<i32>} : memref<1x64x64xf32, #tpu.memory_space<vmem>>, vector<1x64x64xf32>,
    %c0_i32 = arith.constant 0 : i32
    %7 = arith.cmpi eq, %arg1, %c0_i32 : i32
    %8 = arith.extui %7 : i1 to i32
    %c0_i32_7 = arith.constant 0 : i32
    %9 = arith.cmpi ne, %8, %c0_i32_7 : i32
    scf.if %9 {
      %cst_16 = arith.constant 0.000000e+00 : f32
      %22 = vector.broadcast %cst_16 : f32 to vector<1x2x64xf32>
      %c0_17 = arith.constant 0 : index
      %c0_18 = arith.constant 0 : index
      %c0_19 = arith.constant 0 : index
      %23 = vector.load %arg5[%c0_17, %c0_18, %c0_19] : memref<1x2x64xf32, #tpu.memory_space<vmem>>, vector<1x2x64xf32>
      tpu.vector_store %arg5[%c0_17, %c0_18, %c0_19], %22 {strides = array<i32>} : memref<1x2x64xf32, #tpu.memory_space<vmem>>, vector<1x2x64xf32>,
    } else {
    }
    %cst_8 = arith.constant dense<0.000000e+00> : vector<64xf32>
    %10 = vector.multi_reduction <add>, %3, %cst_8 [0] : vector<64x64xf32> to vector<64xf32>
    %11 = vector.shape_cast %10 : vector<64xf32> to vector<1x64xf32>
    %12 = arith.mulf %3, %3 : vector<64x64xf32>
    %cst_9 = arith.constant dense<0.000000e+00> : vector<64xf32>
    %13 = vector.multi_reduction <add>, %12, %cst_9 [0] : vector<64x64xf32> to vector<64xf32>
    %14 = vector.shape_cast %13 : vector<64xf32> to vector<1x64xf32>
    %c0_10 = arith.constant 0 : index
    %c0_11 = arith.constant 0 : index
    %c0_12 = arith.constant 0 : index
    %15 = vector.load %arg5[%c0_10, %c0_11, %c0_12] : memref<1x2x64xf32, #tpu.memory_space<vmem>>, vector<1x2x64xf32>
    %16 = vector.shape_cast %15 : vector<1x2x64xf32> to vector<2x64xf32>
    %17 = tpu.concatenate %11, %14 in 0 : vector<1x64xf32>, vector<1x64xf32> -> vector<2x64xf32>
    %18 = arith.addf %16, %17 : vector<2x64xf32>
    %c0_13 = arith.constant 0 : index
    %c0_14 = arith.constant 0 : index
    %c0_15 = arith.constant 0 : index
    %19 = vector.load %arg5[%c0_13, %c0_14, %c0_15] : memref<1x2x64xf32, #tpu.memory_space<vmem>>, vector<1x2x64xf32>
    %20 = vector.shape_cast %19 : vector<1x2x64xf32> to vector<2x64xf32>
    %21 = vector.shape_cast %18 : vector<2x64xf32> to vector<1x2x64xf32>
    tpu.vector_store %arg5[%c0_13, %c0_14, %c0_15], %21 {strides = array<i32>} : memref<1x2x64xf32, #tpu.memory_space<vmem>>, vector<1x2x64xf32>,
    return
  }
  func.func @transform_0(%arg0: i32, %arg1: i32) -> (i32, i32, i32) {
    %c0_i32 = arith.constant 0 : i32
    %c0_i32_0 = arith.constant 0 : i32
    return %arg0, %arg1, %c0_i32 : i32, i32, i32
  }
  func.func @transform_1(%arg0: i32, %arg1: i32) -> (i32, i32) {
    %c0_i32 = arith.constant 0 : i32
    %c0_i32_0 = arith.constant 0 : i32
    %c0_i32_1 = arith.constant 0 : i32
    return %c0_i32, %c0_i32_0 : i32, i32
  }
  func.func @transform_2(%arg0: i32, %arg1: i32) -> (i32, i32, i32) {
    %c0_i32 = arith.constant 0 : i32
    %c0_i32_0 = arith.constant 0 : i32
    return %arg0, %arg1, %c0_i32 : i32, i32, i32
  }
  func.func @transform_3(%arg0: i32, %arg1: i32) -> (i32, i32, i32) {
    %c0_i32 = arith.constant 0 : i32
    %c0_i32_0 = arith.constant 0 : i32
    %c0_i32_1 = arith.constant 0 : i32
    return %arg0, %c0_i32, %c0_i32_0 : i32, i32, i32
  }
}

module attributes {stable_mosaic.version = 11 : i64} {
  func.func @vae_head_kernel(%arg0: i32, %arg1: i32, %arg2: memref<8x2048xf32, #tpu.memory_space<vmem>>, %arg3: memref<1x2048xf32, #tpu.memory_space<vmem>>, %arg4: memref<1x2048xf32, #tpu.memory_space<vmem>>, %arg5: memref<2048x128xf32, #tpu.memory_space<vmem>>, %arg6: memref<1x128xf32, #tpu.memory_space<vmem>>, %arg7: memref<128x128xf32, #tpu.memory_space<vmem>>, %arg8: memref<1x128xf32, #tpu.memory_space<vmem>>, %arg9: memref<8x128xf32, #tpu.memory_space<vmem>>, %arg10: memref<8x128xf32, #tpu.memory_space<vmem>>) attributes {dimension_semantics = [#tpu.dimension_semantics<parallel>, #tpu.dimension_semantics<arbitrary>], iteration_bounds = array<i64: 1, 2>, scalar_prefetch = 0 : i64, scratch_operands = 1 : i64, tpu.core_type = #tpu.core_type<tc>, window_params = [{transform_indices = @transform_0, window_bounds = array<i64: 8, 2048>}, {transform_indices = @transform_1, window_bounds = array<i64: 1, 2048>}, {transform_indices = @transform_2, window_bounds = array<i64: 1, 2048>}, {transform_indices = @transform_3, window_bounds = array<i64: 2048, 128>}, {pipeline_mode = #tpu.pipeline_mode<synchronous>, transform_indices = @transform_4, window_bounds = array<i64: 1, 128>}, {pipeline_mode = #tpu.pipeline_mode<synchronous>, transform_indices = @transform_5, window_bounds = array<i64: 128, 128>}, {pipeline_mode = #tpu.pipeline_mode<synchronous>, transform_indices = @transform_6, window_bounds = array<i64: 1, 128>}, {transform_indices = @transform_7, window_bounds = array<i64: 8, 128>}]} {
    %c0_i32 = arith.constant 0 : i32
    %0 = arith.cmpi eq, %arg1, %c0_i32 : i32
    %1 = arith.extui %0 : i1 to i32
    %c0_i32_0 = arith.constant 0 : i32
    %2 = arith.cmpi ne, %1, %c0_i32_0 : i32
    scf.if %2 {
      %cst_14 = arith.constant 0.000000e+00 : f32
      %20 = vector.broadcast %cst_14 : f32 to vector<8x128xf32>
      %c0_15 = arith.constant 0 : index
      %c0_16 = arith.constant 0 : index
      %21 = vector.load %arg10[%c0_15, %c0_16] : memref<8x128xf32, #tpu.memory_space<vmem>>, vector<8x128xf32>
      tpu.vector_store %arg10[%c0_15, %c0_16], %20 {strides = array<i32>} : memref<8x128xf32, #tpu.memory_space<vmem>>, vector<8x128xf32>,
    } else {
    }
    %c0 = arith.constant 0 : index
    %c0_1 = arith.constant 0 : index
    %3 = vector.load %arg2[%c0, %c0_1] : memref<8x2048xf32, #tpu.memory_space<vmem>>, vector<8x2048xf32>
    %c0_2 = arith.constant 0 : index
    %c0_3 = arith.constant 0 : index
    %4 = vector.load %arg3[%c0_2, %c0_3] : memref<1x2048xf32, #tpu.memory_space<vmem>>, vector<1x2048xf32>
    %5 = vector.broadcast %4 : vector<1x2048xf32> to vector<8x2048xf32>
    %6 = arith.mulf %3, %5 : vector<8x2048xf32>
    %c0_4 = arith.constant 0 : index
    %c0_5 = arith.constant 0 : index
    %7 = vector.load %arg4[%c0_4, %c0_5] : memref<1x2048xf32, #tpu.memory_space<vmem>>, vector<1x2048xf32>
    %8 = vector.broadcast %7 : vector<1x2048xf32> to vector<8x2048xf32>
    %9 = arith.addf %6, %8 : vector<8x2048xf32>
    %cst = arith.constant 0.000000e+00 : f32
    %10 = vector.broadcast %cst : f32 to vector<8x2048xf32>
    %11 = arith.maximumf %9, %10 : vector<8x2048xf32>
    %c0_6 = arith.constant 0 : index
    %c0_7 = arith.constant 0 : index
    %12 = vector.load %arg10[%c0_6, %c0_7] : memref<8x128xf32, #tpu.memory_space<vmem>>, vector<8x128xf32>
    %c0_8 = arith.constant 0 : index
    %c0_9 = arith.constant 0 : index
    %13 = vector.load %arg5[%c0_8, %c0_9] : memref<2048x128xf32, #tpu.memory_space<vmem>>, vector<2048x128xf32>
    %cst_10 = arith.constant dense<0.000000e+00> : vector<8x128xf32>
    %14 = tpu.matmul %11, %13, %cst_10 {dimension_numbers = #tpu.dot_dimension_numbers<[1], [0], [0], [1], [0, 0, 1, 1], [], []>} : vector<8x2048xf32>, vector<2048x128xf32>, vector<8x128xf32> -> vector<8x128xf32>
    %15 = arith.addf %12, %14 : vector<8x128xf32>
    %c0_11 = arith.constant 0 : index
    %c0_12 = arith.constant 0 : index
    %16 = vector.load %arg10[%c0_11, %c0_12] : memref<8x128xf32, #tpu.memory_space<vmem>>, vector<8x128xf32>
    tpu.vector_store %arg10[%c0_11, %c0_12], %15 {strides = array<i32>} : memref<8x128xf32, #tpu.memory_space<vmem>>, vector<8x128xf32>,
    %c1_i32 = arith.constant 1 : i32
    %17 = arith.cmpi eq, %arg1, %c1_i32 : i32
    %18 = arith.extui %17 : i1 to i32
    %c0_i32_13 = arith.constant 0 : i32
    %19 = arith.cmpi ne, %18, %c0_i32_13 : i32
    scf.if %19 {
      %c0_14 = arith.constant 0 : index
      %c0_15 = arith.constant 0 : index
      %20 = vector.load %arg10[%c0_14, %c0_15] : memref<8x128xf32, #tpu.memory_space<vmem>>, vector<8x128xf32>
      %c0_16 = arith.constant 0 : index
      %c0_17 = arith.constant 0 : index
      %21 = vector.load %arg6[%c0_16, %c0_17] : memref<1x128xf32, #tpu.memory_space<vmem>>, vector<1x128xf32>
      %22 = vector.broadcast %21 : vector<1x128xf32> to vector<8x128xf32>
      %23 = arith.addf %20, %22 : vector<8x128xf32>
      %cst_18 = arith.constant 0.000000e+00 : f32
      %24 = vector.broadcast %cst_18 : f32 to vector<8x128xf32>
      %25 = arith.maximumf %23, %24 : vector<8x128xf32>
      %26 = vector.broadcast %cst_18 : f32 to vector<8x128xf32>
      %27 = arith.subf %23, %26 : vector<8x128xf32>
      %28 = arith.cmpf one, %27, %27 : vector<8x128xf32>
      %29 = vector.broadcast %cst_18 : f32 to vector<8x128xf32>
      %30 = arith.addf %23, %29 : vector<8x128xf32>
      %31 = math.absf %27 : vector<8x128xf32>
      %cst_19 = arith.constant 0.000000e+00 : f32
      %32 = vector.broadcast %cst_19 : f32 to vector<8x128xf32>
      %33 = arith.subf %32, %31 : vector<8x128xf32>
      %34 = math.exp %33 : vector<8x128xf32>
      %35 = math.log1p %34 : vector<8x128xf32>
      %36 = arith.addf %25, %35 : vector<8x128xf32>
      %37 = arith.select %28, %30, %36 : vector<8x128xi1>, vector<8x128xf32>
      %c0_20 = arith.constant 0 : index
      %c0_21 = arith.constant 0 : index
      %38 = vector.load %arg7[%c0_20, %c0_21] : memref<128x128xf32, #tpu.memory_space<vmem>>, vector<128x128xf32>
      %cst_22 = arith.constant dense<0.000000e+00> : vector<8x128xf32>
      %39 = tpu.matmul %37, %38, %cst_22 {dimension_numbers = #tpu.dot_dimension_numbers<[1], [0], [0], [1], [0, 0, 1, 1], [], []>} : vector<8x128xf32>, vector<128x128xf32>, vector<8x128xf32> -> vector<8x128xf32>
      %c0_23 = arith.constant 0 : index
      %c0_24 = arith.constant 0 : index
      %40 = vector.load %arg8[%c0_23, %c0_24] : memref<1x128xf32, #tpu.memory_space<vmem>>, vector<1x128xf32>
      %41 = vector.broadcast %40 : vector<1x128xf32> to vector<8x128xf32>
      %42 = arith.addf %39, %41 : vector<8x128xf32>
      %43 = tpu.iota {dimensions = array<i32: 1>} : vector<8x128xi32>
      %c16_i32 = arith.constant 16 : i32
      %44 = vector.broadcast %c16_i32 : i32 to vector<8x128xi32>
      %45 = arith.cmpi slt, %43, %44 : vector<8x128xi32>
      %cst_25 = arith.constant 0.000000e+00 : f32
      %46 = vector.broadcast %cst_25 : f32 to vector<8x128xf32>
      %47 = arith.select %45, %46, %42 : vector<8x128xi1>, vector<8x128xf32>
      %48 = math.exp %47 : vector<8x128xf32>
      %49 = arith.select %45, %42, %48 : vector<8x128xi1>, vector<8x128xf32>
      %c0_26 = arith.constant 0 : index
      %c0_27 = arith.constant 0 : index
      %50 = vector.load %arg9[%c0_26, %c0_27] : memref<8x128xf32, #tpu.memory_space<vmem>>, vector<8x128xf32>
      tpu.vector_store %arg9[%c0_26, %c0_27], %49 {strides = array<i32>} : memref<8x128xf32, #tpu.memory_space<vmem>>, vector<8x128xf32>,
    } else {
    }
    return
  }
  func.func @transform_0(%arg0: i32, %arg1: i32) -> (i32, i32) {
    %c0_i32 = arith.constant 0 : i32
    return %arg0, %arg1 : i32, i32
  }
  func.func @transform_1(%arg0: i32, %arg1: i32) -> (i32, i32) {
    %c0_i32 = arith.constant 0 : i32
    %c0_i32_0 = arith.constant 0 : i32
    return %c0_i32, %arg1 : i32, i32
  }
  func.func @transform_2(%arg0: i32, %arg1: i32) -> (i32, i32) {
    %c0_i32 = arith.constant 0 : i32
    %c0_i32_0 = arith.constant 0 : i32
    return %c0_i32, %arg1 : i32, i32
  }
  func.func @transform_3(%arg0: i32, %arg1: i32) -> (i32, i32) {
    %c0_i32 = arith.constant 0 : i32
    %c0_i32_0 = arith.constant 0 : i32
    return %arg1, %c0_i32 : i32, i32
  }
  func.func @transform_4(%arg0: i32, %arg1: i32) -> (i32, i32) {
    %c0_i32 = arith.constant 0 : i32
    %c0_i32_0 = arith.constant 0 : i32
    %c0_i32_1 = arith.constant 0 : i32
    return %c0_i32, %c0_i32_0 : i32, i32
  }
  func.func @transform_5(%arg0: i32, %arg1: i32) -> (i32, i32) {
    %c0_i32 = arith.constant 0 : i32
    %c0_i32_0 = arith.constant 0 : i32
    %c0_i32_1 = arith.constant 0 : i32
    return %c0_i32, %c0_i32_0 : i32, i32
  }
  func.func @transform_6(%arg0: i32, %arg1: i32) -> (i32, i32) {
    %c0_i32 = arith.constant 0 : i32
    %c0_i32_0 = arith.constant 0 : i32
    %c0_i32_1 = arith.constant 0 : i32
    return %c0_i32, %c0_i32_0 : i32, i32
  }
  func.func @transform_7(%arg0: i32, %arg1: i32) -> (i32, i32) {
    %c0_i32 = arith.constant 0 : i32
    %c0_i32_0 = arith.constant 0 : i32
    return %arg0, %c0_i32 : i32, i32
  }
}

</mosaic_0001>

<llo_original>
// kernel: tile.13
$region0: #{tile.13}
  #allocation0 [shape = 's32[1]{0}', space=sflag, size = 0x4, scoped, tag = 'scoped memory for tile.13']
  %s0 = inlined_call_operand.vmem [shape: f32[64], index: 0, kind: input, shape index: {}]
  %s1 = inlined_call_operand.vmem [shape: f32[64,64], index: 1, kind: output, shape index: {}]
  // Predicated region
  $region2: #{tile.13} parent=0 // pred_check
    _
  $region3: #{tile.13} parent=0 // pred_check_branch
    %3 = sbr.rel (0) target = $region5
  $region4: #{tile.13} parent=0 // pred_region
    _
  $region5: #{tile.13} parent=0 // pred_fallthru
    _
  %v4 = vld [vmem:[%s0] ss:$0 sm:$0xff]
  %5 = vst [vmem:[%s1] sm:$0xff] %v4
  %s6 = scalar_lea.vmem %s1, 8
  %7 = vst [vmem:[%s6] sm:$0xff] %v4
  %s8 = scalar_lea.vmem %s1, 16
  %9 = vst [vmem:[%s8] sm:$0xff] %v4
  %s10 = scalar_lea.vmem %s1, 24
  %11 = vst [vmem:[%s10] sm:$0xff] %v4
  %s12 = scalar_lea.vmem %s1, 32
  %13 = vst [vmem:[%s12] sm:$0xff] %v4
  %s14 = scalar_lea.vmem %s1, 40
  %15 = vst [vmem:[%s14] sm:$0xff] %v4
  %s16 = scalar_lea.vmem %s1, 48
  %17 = vst [vmem:[%s16] sm:$0xff] %v4
  %s18 = scalar_lea.vmem %s1, 56
  %19 = vst [vmem:[%s18] sm:$0xff] %v4

// kernel: tile.14
$region0: #{tile.14}
  %s0 = inlined_call_operand.vmem [shape: f32[64,64], index: 0, kind: input, shape index: {}]
  %s1 = inlined_call_operand.vmem [shape: f32[1,4096], index: 1, kind: output, shape index: {}]
  $region1: #{tile.14} parent=0
    #allocation0 [shape = 'u8[131072]{0}', space=vmem, size = 0x20000, scoped, tag = 'scoped mem for output reshape']
    %v2 = vld [vmem:[%s0] ss:$2 sm:$0xff]
    %vm3 = vcmask 523264
    %4 = vst.msk [vmem:[#allocation0] ss:$8 sm:$0xf] %vm3, %v2
    %5 = vst.msk [vmem:[#allocation0] ss:$8 sm:$0xf0] %vm3, %v2
    %s6 = scalar_lea.vmem %s0, 16
    %v7 = vld [vmem:[%s6] ss:$2 sm:$0xff]
    %vm8 = vcmask 523264
    %s9 = scalar_lea.vmem [#allocation0], 64
    %10 = vst.msk [vmem:[%s9] ss:$8 sm:$0xf] %vm8, %v7
    %s11 = scalar_lea.vmem [#allocation0], 64
    %12 = vst.msk [vmem:[%s11] ss:$8 sm:$0xf0] %vm8, %v7
    %s13 = scalar_lea.vmem %s0, 32
    %v14 = vld [vmem:[%s13] ss:$2 sm:$0xff]
    %vm15 = vcmask 523264
    %s16 = scalar_lea.vmem [#allocation0], 128
    %17 = vst.msk [vmem:[%s16] ss:$8 sm:$0xf] %vm15, %v14
    %s18 = scalar_lea.vmem [#allocation0], 128
    %19 = vst.msk [vmem:[%s18] ss:$8 sm:$0xf0] %vm15, %v14
    %s20 = scalar_lea.vmem %s0, 48
    %v21 = vld [vmem:[%s20] ss:$2 sm:$0xff]
    %vm22 = vcmask 523264
    %s23 = scalar_lea.vmem [#allocation0], 192
    %24 = vst.msk [vmem:[%s23] ss:$8 sm:$0xf] %vm22, %v21
    %s25 = scalar_lea.vmem [#allocation0], 192
    %26 = vst.msk [vmem:[%s25] ss:$8 sm:$0xf0] %vm22, %v21
    %s27 = scalar_lea.vmem %s0, 1
    %v28 = vld [vmem:[%s27] ss:$2 sm:$0xff]
    %29 = vrot.lane.b32.xlu0 %v28, 64
    %v30 = vpop.permute.xlu0 %29
    %vm31 = vcmask 1048064
    %32 = vst.msk [vmem:[#allocation0] ss:$8 sm:$0xf] %vm31, %v30
    %33 = vst.msk [vmem:[#allocation0] ss:$8 sm:$0xf0] %vm31, %v30
    %s34 = scalar_lea.vmem %s0, 17
    %v35 = vld [vmem:[%s34] ss:$2 sm:$0xff]
    %36 = vrot.lane.b32.xlu0 %v35, 64
    %v37 = vpop.permute.xlu0 %36
    %vm38 = vcmask 1048064
    %s39 = scalar_lea.vmem [#allocation0], 64
    %40 = vst.msk [vmem:[%s39] ss:$8 sm:$0xf] %vm38, %v37
    %s41 = scalar_lea.vmem [#allocation0], 64
    %42 = vst.msk [vmem:[%s41] ss:$8 sm:$0xf0] %vm38, %v37
    %s43 = scalar_lea.vmem %s0, 33
    %v44 = vld [vmem:[%s43] ss:$2 sm:$0xff]
    %45 = vrot.lane.b32.xlu0 %v44, 64
    %v46 = vpop.permute.xlu0 %45
    %vm47 = vcmask 1048064
    %s48 = scalar_lea.vmem [#allocation0], 128
    %49 = vst.msk [vmem:[%s48] ss:$8 sm:$0xf] %vm47, %v46
    %s50 = scalar_lea.vmem [#allocation0], 128
    %51 = vst.msk [vmem:[%s50] ss:$8 sm:$0xf0] %vm47, %v46
    %s52 = scalar_lea.vmem %s0, 49
    %v53 = vld [vmem:[%s52] ss:$2 sm:$0xff]
    %54 = vrot.lane.b32.xlu0 %v53, 64
    %v55 = vpop.permute.xlu0 %54
    %vm56 = vcmask 1048064
    %s57 = scalar_lea.vmem [#allocation0], 192
    %58 = vst.msk [vmem:[%s57] ss:$8 sm:$0xf] %vm56, %v55
    %s59 = scalar_lea.vmem [#allocation0], 192
    %60 = vst.msk [vmem:[%s59] ss:$8 sm:$0xf0] %vm56, %v55
    %s62 = sshll.u32 1, 1
    %s63 = ssub.s32 %s62, 1
    %v65 = vld [vmem:[#allocation0] sm:%s63]
    %s66 = sshll.u32 1, 1
    %s67 = ssub.s32 %s66, 1
    %68 = vst [vmem:[%s1] sm:%s67] %v65
    %s69 = scalar_lea.vmem [#allocation0], 8
    %v70 = vld [vmem:[%s69] sm:%s63]
    %s71 = sshll.u32 1, 1
    %s72 = ssub.s32 %s71, 1
    %s73 = scalar_lea.vmem %s1, 1
    %74 = vst [vmem:[%s73] sm:%s72] %v70
    %s75 = scalar_lea.vmem [#allocation0], 16
    %v76 = vld [vmem:[%s75] sm:%s63]
    %s77 = sshll.u32 1, 1
    %s78 = ssub.s32 %s77, 1
    %s79 = smul.addr 1, 2
    %s80 = scalar_lea.vmem %s1, %s79
    %81 = vst [vmem:[%s80] sm:%s78] %v76
    %s82 = scalar_lea.vmem [#allocation0], 24
    %v83 = vld [vmem:[%s82] sm:%s63]
    %s84 = sshll.u32 1, 1
    %s85 = ssub.s32 %s84, 1
    %s86 = smul.addr 1, 3
    %s87 = scalar_lea.vmem %s1, %s86
    %88 = vst [vmem:[%s87] sm:%s85] %v83
    %s89 = scalar_lea.vmem [#allocation0], 32
    %v90 = vld [vmem:[%s89] sm:%s63]
    %s91 = sshll.u32 1, 1
    %s92 = ssub.s32 %s91, 1
    %s93 = smul.addr 1, 4
    %s94 = scalar_lea.vmem %s1, %s93
    %95 = vst [vmem:[%s94] sm:%s92] %v90
    %s96 = scalar_lea.vmem [#allocation0], 40
    %v97 = vld [vmem:[%s96] sm:%s63]
    %s98 = sshll.u32 1, 1
    %s99 = ssub.s32 %s98, 1
    %s100 = smul.addr 1, 5
    %s101 = scalar_lea.vmem %s1, %s100
    %102 = vst [vmem:[%s101] sm:%s99] %v97
    %s103 = scalar_lea.vmem [#allocation0], 48
    %v104 = vld [vmem:[%s103] sm:%s63]
    %s105 = sshll.u32 1, 1
    %s106 = ssub.s32 %s105, 1
    %s107 = smul.addr 1, 6
    %s108 = scalar_lea.vmem %s1, %s107
    %109 = vst [vmem:[%s108] sm:%s106] %v104
    %s110 = scalar_lea.vmem [#allocation0], 56
    %v111 = vld [vmem:[%s110] sm:%s63]
    %s112 = sshll.u32 1, 1
    %s113 = ssub.s32 %s112, 1
    %s114 = smul.addr 1, 7
    %s115 = scalar_lea.vmem %s1, %s114
    %116 = vst [vmem:[%s115] sm:%s113] %v111
    %s117 = scalar_lea.vmem [#allocation0], 64
    %v118 = vld [vmem:[%s117] sm:%s63]
    %s119 = sshll.u32 1, 1
    %s120 = ssub.s32 %s119, 1
    %s121 = smul.addr 1, 8
    %s122 = scalar_lea.vmem %s1, %s121
    %123 = vst [vmem:[%s122] sm:%s120] %v118
    %s124 = scalar_lea.vmem [#allocation0], 72
    %v125 = vld [vmem:[%s124] sm:%s63]
    %s126 = sshll.u32 1, 1
    %s127 = ssub.s32 %s126, 1
    %s128 = smul.addr 1, 9
    %s129 = scalar_lea.vmem %s1, %s128
    %130 = vst [vmem:[%s129] sm:%s127] %v125
    %s131 = scalar_lea.vmem [#allocation0], 80
    %v132 = vld [vmem:[%s131] sm:%s63]
    %s133 = sshll.u32 1, 1
    %s134 = ssub.s32 %s133, 1
    %s135 = smul.addr 1, 10
    %s136 = scalar_lea.vmem %s1, %s135
    %137 = vst [vmem:[%s136] sm:%s134] %v132
    %s138 = scalar_lea.vmem [#allocation0], 88
    %v139 = vld [vmem:[%s138] sm:%s63]
    %s140 = sshll.u32 1, 1
    %s141 = ssub.s32 %s140, 1
    %s142 = smul.addr 1, 11
    %s143 = scalar_lea.vmem %s1, %s142
    %144 = vst [vmem:[%s143] sm:%s141] %v139
    %s145 = scalar_lea.vmem [#allocation0], 96
    %v146 = vld [vmem:[%s145] sm:%s63]
    %s147 = sshll.u32 1, 1
    %s148 = ssub.s32 %s147, 1
    %s149 = smul.addr 1, 12
    %s150 = scalar_lea.vmem %s1, %s149
    %151 = vst [vmem:[%s150] sm:%s148] %v146
    %s152 = scalar_lea.vmem [#allocation0], 104
    %v153 = vld [vmem:[%s152] sm:%s63]
    %s154 = sshll.u32 1, 1
    %s155 = ssub.s32 %s154, 1
    %s156 = smul.addr 1, 13
    %s157 = scalar_lea.vmem %s1, %s156
    %158 = vst [vmem:[%s157] sm:%s155] %v153
    %s159 = scalar_lea.vmem [#allocation0], 112
    %v160 = vld [vmem:[%s159] sm:%s63]
    %s161 = sshll.u32 1, 1
    %s162 = ssub.s32 %s161, 1
    %s163 = smul.addr 1, 14
    %s164 = scalar_lea.vmem %s1, %s163
    %165 = vst [vmem:[%s164] sm:%s162] %v160
    %s166 = scalar_lea.vmem [#allocation0], 120
    %v167 = vld [vmem:[%s166] sm:%s63]
    %s168 = sshll.u32 1, 1
    %s169 = ssub.s32 %s168, 1
    %s170 = smul.addr 1, 15
    %s171 = scalar_lea.vmem %s1, %s170
    %172 = vst [vmem:[%s171] sm:%s169] %v167
    %s173 = scalar_lea.vmem [#allocation0], 128
    %v174 = vld [vmem:[%s173] sm:%s63]
    %s175 = sshll.u32 1, 1
    %s176 = ssub.s32 %s175, 1
    %s177 = smul.addr 1, 16
    %s178 = scalar_lea.vmem %s1, %s177
    %179 = vst [vmem:[%s178] sm:%s176] %v174
    %s180 = scalar_lea.vmem [#allocation0], 136
    %v181 = vld [vmem:[%s180] sm:%s63]
    %s182 = sshll.u32 1, 1
    %s183 = ssub.s32 %s182, 1
    %s184 = smul.addr 1, 17
    %s185 = scalar_lea.vmem %s1, %s184
    %186 = vst [vmem:[%s185] sm:%s183] %v181
    %s187 = scalar_lea.vmem [#allocation0], 144
    %v188 = vld [vmem:[%s187] sm:%s63]
    %s189 = sshll.u32 1, 1
    %s190 = ssub.s32 %s189, 1
    %s191 = smul.addr 1, 18
    %s192 = scalar_lea.vmem %s1, %s191
    %193 = vst [vmem:[%s192] sm:%s190] %v188
    %s194 = scalar_lea.vmem [#allocation0], 152
    %v195 = vld [vmem:[%s194] sm:%s63]
    %s196 = sshll.u32 1, 1
    %s197 = ssub.s32 %s196, 1
    %s198 = smul.addr 1, 19
    %s199 = scalar_lea.vmem %s1, %s198
    %200 = vst [vmem:[%s199] sm:%s197] %v195
    %s201 = scalar_lea.vmem [#allocation0], 160
    %v202 = vld [vmem:[%s201] sm:%s63]
    %s203 = sshll.u32 1, 1
    %s204 = ssub.s32 %s203, 1
    %s205 = smul.addr 1, 20
    %s206 = scalar_lea.vmem %s1, %s205
    %207 = vst [vmem:[%s206] sm:%s204] %v202
    %s208 = scalar_lea.vmem [#allocation0], 168
    %v209 = vld [vmem:[%s208] sm:%s63]
    %s210 = sshll.u32 1, 1
    %s211 = ssub.s32 %s210, 1
    %s212 = smul.addr 1, 21
    %s213 = scalar_lea.vmem %s1, %s212
    %214 = vst [vmem:[%s213] sm:%s211] %v209
    %s215 = scalar_lea.vmem [#allocation0], 176
    %v216 = vld [vmem:[%s215] sm:%s63]
    %s217 = sshll.u32 1, 1
    %s218 = ssub.s32 %s217, 1
    %s219 = smul.addr 1, 22
    %s220 = scalar_lea.vmem %s1, %s219
    %221 = vst [vmem:[%s220] sm:%s218] %v216
    %s222 = scalar_lea.vmem [#allocation0], 184
    %v223 = vld [vmem:[%s222] sm:%s63]
    %s224 = sshll.u32 1, 1
    %s225 = ssub.s32 %s224, 1
    %s226 = smul.addr 1, 23
    %s227 = scalar_lea.vmem %s1, %s226
    %228 = vst [vmem:[%s227] sm:%s225] %v223
    %s229 = scalar_lea.vmem [#allocation0], 192
    %v230 = vld [vmem:[%s229] sm:%s63]
    %s231 = sshll.u32 1, 1
    %s232 = ssub.s32 %s231, 1
    %s233 = smul.addr 1, 24
    %s234 = scalar_lea.vmem %s1, %s233
    %235 = vst [vmem:[%s234] sm:%s232] %v230
    %s236 = scalar_lea.vmem [#allocation0], 200
    %v237 = vld [vmem:[%s236] sm:%s63]
    %s238 = sshll.u32 1, 1
    %s239 = ssub.s32 %s238, 1
    %s240 = smul.addr 1, 25
    %s241 = scalar_lea.vmem %s1, %s240
    %242 = vst [vmem:[%s241] sm:%s239] %v237
    %s243 = scalar_lea.vmem [#allocation0], 208
    %v244 = vld [vmem:[%s243] sm:%s63]
    %s245 = sshll.u32 1, 1
    %s246 = ssub.s32 %s245, 1
    %s247 = smul.addr 1, 26
    %s248 = scalar_lea.vmem %s1, %s247
    %249 = vst [vmem:[%s248] sm:%s246] %v244
    %s250 = scalar_lea.vmem [#allocation0], 216
    %v251 = vld [vmem:[%s250] sm:%s63]
    %s252 = sshll.u32 1, 1
    %s253 = ssub.s32 %s252, 1
    %s254 = smul.addr 1, 27
    %s255 = scalar_lea.vmem %s1, %s254
    %256 = vst [vmem:[%s255] sm:%s253] %v251
    %s257 = scalar_lea.vmem [#allocation0], 224
    %v258 = vld [vmem:[%s257] sm:%s63]
    %s259 = sshll.u32 1, 1
    %s260 = ssub.s32 %s259, 1
    %s261 = smul.addr 1, 28
    %s262 = scalar_lea.vmem %s1, %s261
    %263 = vst [vmem:[%s262] sm:%s260] %v258
    %s264 = scalar_lea.vmem [#allocation0], 232
    %v265 = vld [vmem:[%s264] sm:%s63]
    %s266 = sshll.u32 1, 1
    %s267 = ssub.s32 %s266, 1
    %s268 = smul.addr 1, 29
    %s269 = scalar_lea.vmem %s1, %s268
    %270 = vst [vmem:[%s269] sm:%s267] %v265
    %s271 = scalar_lea.vmem [#allocation0], 240
    %v272 = vld [vmem:[%s271] sm:%s63]
    %s273 = sshll.u32 1, 1
    %s274 = ssub.s32 %s273, 1
    %s275 = smul.addr 1, 30
    %s276 = scalar_lea.vmem %s1, %s275
    %277 = vst [vmem:[%s276] sm:%s274] %v272
    %s278 = scalar_lea.vmem [#allocation0], 248
    %v279 = vld [vmem:[%s278] sm:%s63]
    %s280 = sshll.u32 1, 1
    %s281 = ssub.s32 %s280, 1
    %s282 = smul.addr 1, 31
    %s283 = scalar_lea.vmem %s1, %s282
    %284 = vst [vmem:[%s283] sm:%s281] %v279

// kernel: encoder_forward.2
$region0: #{encoder_forward.2}
  #allocation0 [shape = 'u32[]', space=smem, size = 0x4, offset = 0x4, fixed_abs, tag = 'smem constant byte address 0x4 - core index']
  #allocation1 [shape = 'u32[144,128]{1,0:T(1,128)}', space=vmem, size = 0x12000, scoped, tag = 'internal scratch']
  %s0 = inlined_call_operand.vmem [shape: f32[2,64,64], index: 0, kind: input, shape index: {}]
  %s1 = inlined_call_operand.vmem [shape: f32[64,64], index: 1, kind: input, shape index: {}]
  %s2 = inlined_call_operand.vmem [shape: f32[2,64,64], index: 2, kind: output, shape index: {0}]
  %s3 = inlined_call_operand.vmem [shape: f32[2,2,64], index: 3, kind: output, shape index: {1}]
  %4 = xla_tuple %s2, %s3
  %s5 = sld [smem:[#allocation0]]
  $region53: #{encoder_forward.2} parent=0
    _
  %s7 = ssub.s32 1, %s5
  %s8 = scalar_select 0, %s7, %s5
  loop: start=0, step=1, limit=4
  $region2: #{encoder_forward.2} parent=0 // loop_pre_header
    _
  $region3: #{encoder_forward.2} parent=0 // loop_header
    %s10 = sphi 0, %s14
    %p11 = scmp.ge.s32.totalorder %s10, 4
    %s17 = sphi 0, %s29
    %s18 = sphi 0, %s25
    %s19 = sphi 0, %s17
    %s20 = sphi 0, %s18
    %s21 = sphi 0, %s19
    %s22 = sphi 0, %s20
    %s34 = sphi 0, %s36
    %s37 = sphi 0, %s34
    %s38 = sphi 0, %s37
    %s54 = sphi 0, %s38
    %s58 = sphi 0, %s58
    %s60 = sphi 0, %s58
    %s61 = sphi 0, %s60
    %s75 = sphi 0, %s61
    %s83 = sphi 0, %s85
    %s86 = sphi 0, %s83
    %s87 = sphi 0, %s86
    %s103 = sphi 0, %s87
    %s109 = sphi 0, %s111
    %s112 = sphi 0, %s109
    %s113 = sphi 0, %s112
    %s129 = sphi 0, %s113
  $region4: #{encoder_forward.2} parent=0 // loop_header_branch
    %13 = sbr.rel (%p11) target = $region8
  $region5: #{encoder_forward.2} parent=0 // loop_body
    %s15 = ssub.s32 %s10, 1
    %s16 = ssub.s32 %s10, 2
    %s23 = sadd.s32 1, %s18
    %p24 = scmp.ge.s32.totalorder %s23, 1
    %s25 = scalar_select %p24, 0, %s23
    %s26 = sadd.s32 1, %s17
    %s27 = scalar_select %p24, %s26, %s17
    %p28 = scmp.ge.s32.totalorder %s27, 2
    %s29 = scalar_select %p28, 0, %s27
    %s30 = ssub.s32 %s17, %s29
    %s31 = ssub.s32 %s18, %s25
    %s32 = sor.u32 %s30, %s31
    %p33 = scmp.eq.s32.totalorder %s32, 0
    %s35 = sadd.s32 %s34, 1
    %s36 = scalar_select %p33, %s34, %s35
    %p39 = pneg %p33
    %p40 = scmp.eq.s32.totalorder %s10, 1
    %p41 = por %p39, %p40
    %p42 = scmp.ne.s32.totalorder %s34, %s37
    %p43 = scmp.eq.s32.totalorder %s10, 0
    %p44 = por %p42, %p43
    %p45 = scmp.ne.s32.totalorder %s34, %s37
    %p46 = scmp.eq.s32.totalorder %s15, 1
    %p47 = por %p45, %p46
    %p48 = scmp.ne.s32.totalorder %s37, %s38
    %p49 = scmp.eq.s32.totalorder %s15, 0
    %p50 = por %p48, %p49
    %p51 = scmp.ne.s32.totalorder %s37, %s38
    %p52 = scmp.eq.s32.totalorder %s16, 1
    %p53 = por %p51, %p52
    %p55 = scmp.ne.s32.totalorder %s38, %s54
    %p56 = scmp.eq.s32.totalorder %s16, 0
    %p57 = por %p55, %p56
    %s59 = sadd.s32 %s58, 1
    %p62 = scmp.eq.s32.totalorder %s10, 1
    %p63 = scmp.ne.s32.totalorder %s58, %s60
    %p64 = scmp.eq.s32.totalorder %s10, 0
    %p65 = por %p63, %p64
    %p66 = scmp.ne.s32.totalorder %s58, %s60
    %p67 = scmp.eq.s32.totalorder %s15, 1
    %p68 = por %p66, %p67
    %p69 = scmp.ne.s32.totalorder %s60, %s61
    %p70 = scmp.eq.s32.totalorder %s15, 0
    %p71 = por %p69, %p70
    %p72 = scmp.ne.s32.totalorder %s60, %s61
    %p73 = scmp.eq.s32.totalorder %s16, 1
    %p74 = por %p72, %p73
    %p76 = scmp.ne.s32.totalorder %s61, %s75
    %p77 = scmp.eq.s32.totalorder %s16, 0
    %p78 = por %p76, %p77
    %s79 = ssub.s32 %s17, %s29
    %s80 = ssub.s32 %s18, %s25
    %s81 = sor.u32 %s79, %s80
    %p82 = scmp.eq.s32.totalorder %s81, 0
    %s84 = sadd.s32 %s83, 1
    %s85 = scalar_select %p82, %s83, %s84
    %p88 = pneg %p82
    %p89 = scmp.eq.s32.totalorder %s10, 1
    %p90 = por %p88, %p89
    %p91 = scmp.ne.s32.totalorder %s83, %s86
    %p92 = scmp.eq.s32.totalorder %s10, 0
    %p93 = por %p91, %p92
    %p94 = scmp.ne.s32.totalorder %s83, %s86
    %p95 = scmp.eq.s32.totalorder %s15, 1
    %p96 = por %p94, %p95
    %p97 = scmp.ne.s32.totalorder %s86, %s87
    %p98 = scmp.eq.s32.totalorder %s15, 0
    %p99 = por %p97, %p98
    %p100 = scmp.ne.s32.totalorder %s86, %s87
    %p101 = scmp.eq.s32.totalorder %s16, 1
    %p102 = por %p100, %p101
    %p104 = scmp.ne.s32.totalorder %s87, %s103
    %p105 = scmp.eq.s32.totalorder %s16, 0
    %p106 = por %p104, %p105
    %s107 = ssub.s32 %s17, %s29
    %p108 = scmp.eq.s32.totalorder %s107, 0
    %s110 = sadd.s32 %s109, 1
    %s111 = scalar_select %p108, %s109, %s110
    %p114 = pneg %p108
    %p115 = scmp.eq.s32.totalorder %s10, 1
    %p116 = por %p114, %p115
    %p117 = scmp.ne.s32.totalorder %s109, %s112
    %p118 = scmp.eq.s32.totalorder %s10, 0
    %p119 = por %p117, %p118
    %p120 = scmp.ne.s32.totalorder %s109, %s112
    %p121 = scmp.eq.s32.totalorder %s15, 1
    %p122 = por %p120, %p121
    %p123 = scmp.ne.s32.totalorder %s112, %s113
    %p124 = scmp.eq.s32.totalorder %s15, 0
    %p125 = por %p123, %p124
    %p126 = scmp.ne.s32.totalorder %s112, %s113
    %p127 = scmp.eq.s32.totalorder %s16, 1
    %p128 = por %p126, %p127
    %p130 = scmp.ne.s32.totalorder %s113, %s129
    %p131 = scmp.eq.s32.totalorder %s16, 0
    %p132 = por %p130, %p131
    %p133 = scmp.le.s32.totalorder 1, %s10
    %p134 = scmp.lt.s32.totalorder %s10, 3
    %p135 = pnand %p133, %p134
    %p136 = pneg %p135
    // Predicated region
    $region9: #{encoder_forward.2} parent=5 // pred_check
      _
    $region10: #{encoder_forward.2} parent=5 // pred_check_branch
      %138 = sbr.rel (%p135) target = $region12
    $region11: #{encoder_forward.2} parent=5 // pred_region
      %s139 = ssub.s32 %s10, 1
      // Predicated region
      $region13: #{encoder_forward.2} parent=11 // pred_check
        %p140 = pneg %p71
      $region14: #{encoder_forward.2} parent=11 // pred_check_branch
        %142 = sbr.rel (%p140) target = $region16
      $region15: #{encoder_forward.2} parent=11 // pred_region
        _
      $region16: #{encoder_forward.2} parent=11 // pred_fallthru
        _
    $region12: #{encoder_forward.2} parent=5 // pred_fallthru
      _
    %p143 = scmp.lt.s32.totalorder %s10, 2
    // Predicated region
    $region17: #{encoder_forward.2} parent=5 // pred_check
      %p144 = pneg %p143
    $region18: #{encoder_forward.2} parent=5 // pred_check_branch
      %146 = sbr.rel (%p144) target = $region20
    $region19: #{encoder_forward.2} parent=5 // pred_region
      // Predicated region
      $region21: #{encoder_forward.2} parent=19 // pred_check
        %p147 = pneg %p44
      $region22: #{encoder_forward.2} parent=19 // pred_check_branch
        %149 = sbr.rel (%p147) target = $region24
      $region23: #{encoder_forward.2} parent=19 // pred_region
        %s150 = smul.u32 8, %s18
        %p151 = scmp.lt.s32.totalorder %s17, 1
        %s152 = scalar_select %p151, %s17, 1
        %p153 = scmp.lt.s32.totalorder %s150, 7
        %s154 = scalar_select %p153, %s150, 7
        %s155 = smul.addr %s152, 8
        %s156 = sadd.s32 %s154, %s155
        %s157 = smul.addr %s156, 8
        %s158 = scalar_lea.vmem %s0, %s157
        %s159 = smul.u32 8, %s18
      $region24: #{encoder_forward.2} parent=19 // pred_fallthru
        _
    $region20: #{encoder_forward.2} parent=5 // pred_fallthru
      _
    %p160 = scmp.le.s32.totalorder 1, %s10
    %p161 = scmp.lt.s32.totalorder %s10, 3
    %p162 = pnand %p160, %p161
    %p163 = pneg %p162
    // Predicated region
    $region25: #{encoder_forward.2} parent=5 // pred_check
      _
    $region26: #{encoder_forward.2} parent=5 // pred_check_branch
      %165 = sbr.rel (%p162) target = $region28
    $region27: #{encoder_forward.2} parent=5 // pred_region
      %s166 = ssub.s32 %s10, 1
      %s167 = smul.u32 8, %s20
      %p168 = scmp.lt.s32.totalorder %s19, 1
      %s169 = scalar_select %p168, %s19, 1
      %p170 = scmp.lt.s32.totalorder %s167, 7
      %s171 = scalar_select %p170, %s167, 7
      %s172 = smul.addr %s169, 8
      %s173 = sadd.s32 %s171, %s172
      %s174 = smul.addr %s173, 8
      %s175 = scalar_lea.vmem %s0, %s174
      %p176 = pneg %p50
      %p177 = pneg %p47
      %p178 = pneg %p71
      %p179 = pneg %p68
      %p180 = pneg %p99
      %p181 = pneg %p96
      %s182 = smul.u32 8, %s20
      %p183 = scmp.lt.s32.totalorder %s19, 1
      %s184 = scalar_select %p183, %s19, 1
      %p185 = scmp.lt.s32.totalorder %s182, 7
      %s186 = scalar_select %p185, %s182, 7
      %s187 = smul.addr %s184, 8
      %s188 = sadd.s32 %s186, %s187
      %s189 = smul.addr %s188, 8
      %s190 = scalar_lea.vmem %s2, %s189
      %p191 = pneg %p125
      %p192 = pneg %p122
      %p193 = scmp.lt.s32.totalorder %s19, 1
      %s194 = scalar_select %p193, %s19, 1
      %s195 = smul.addr %s194, 2
      %s196 = scalar_lea.vmem %s3, %s195
      %s197 = smul.u32 8, %s20
      %p198 = scmp.lt.s32.totalorder %s19, 1
      %s199 = scalar_select %p198, %s19, 1
      %p200 = scmp.lt.s32.totalorder %s197, 7
      %s201 = scalar_select %p200, %s197, 7
      %s202 = smul.addr %s199, 8
      %s203 = sadd.s32 %s201, %s202
      %s204 = smul.addr %s203, 8
      %s205 = scalar_lea.vmem %s0, %s204
      %s206 = smul.u32 8, %s20
      %s207 = smul.u32 8, %s20
      %p208 = scmp.lt.s32.totalorder %s19, 1
      %s209 = scalar_select %p208, %s19, 1
      %p210 = scmp.lt.s32.totalorder %s207, 7
      %s211 = scalar_select %p210, %s207, 7
      %s212 = smul.addr %s209, 8
      %s213 = sadd.s32 %s211, %s212
      %s214 = smul.addr %s213, 8
      %s215 = scalar_lea.vmem %s2, %s214
      %s216 = smul.u32 8, %s20
      %p217 = scmp.lt.s32.totalorder %s19, 1
      %s218 = scalar_select %p217, %s19, 1
      %s219 = smul.addr %s218, 2
      %s220 = scalar_lea.vmem %s3, %s219
      %v221 = vld [vmem:[%s205] sm:$0xff]
      %v222 = vld [vmem:[%s205 + $0x8] sm:$0xff]
      %v223 = vld [vmem:[%s205 + $0x10] sm:$0xff]
      %v224 = vld [vmem:[%s205 + $0x18] sm:$0xff]
      %v225 = vld [vmem:[%s205 + $0x20] sm:$0xff]
      %v226 = vld [vmem:[%s205 + $0x28] sm:$0xff]
      %v227 = vld [vmem:[%s205 + $0x30] sm:$0xff]
      %v228 = vld [vmem:[%s205 + $0x38] sm:$0xff]
      %v229 = vld [vmem:[%s1] sm:$0xff]
      %v230 = vld [vmem:[%s1 + $0x8] sm:$0xff]
      %v231 = vld [vmem:[%s1 + $0x10] sm:$0xff]
      %v232 = vld [vmem:[%s1 + $0x18] sm:$0xff]
      %v233 = vld [vmem:[%s1 + $0x20] sm:$0xff]
      %v234 = vld [vmem:[%s1 + $0x28] sm:$0xff]
      %v235 = vld [vmem:[%s1 + $0x30] sm:$0xff]
      %v236 = vld [vmem:[%s1 + $0x38] sm:$0xff]
      %vm237 = vcmask 523264
      %v239 = vsel %vm237, %v221, 0
      %v242 = vsel %vm237, %v222, 0
      %v245 = vsel %vm237, %v223, 0
      %v248 = vsel %vm237, %v224, 0
      %v251 = vsel %vm237, %v225, 0
      %v254 = vsel %vm237, %v226, 0
      %v257 = vsel %vm237, %v227, 0
      %v260 = vsel %vm237, %v228, 0
      %262 = vmatprep.subr.mxu0 0.0
      %263 = vmatpush1.msra.mxu0 0.0
      %264 = vmatprep.subr.mxu0 0.0
      %265 = vmatpush1.msra.mxu0 0.0
      %266 = vmatprep.subr.mxu0 0.0
      %267 = vmatpush1.msra.mxu0 0.0
      %268 = vmatprep.subr.mxu0 0.0
      %269 = vmatpush1.msra.mxu0 0.0
      %270 = vmatprep.subr.mxu0 0.0
      %271 = vmatpush1.msra.mxu0 0.0
      %272 = vmatprep.subr.mxu0 0.0
      %273 = vmatpush1.msra.mxu0 0.0
      %274 = vmatprep.subr.mxu0 0.0
      %275 = vmatpush1.msra.mxu0 0.0
      %276 = vmatprep.subr.mxu0 0.0
      %277 = vmatpush1.msra.mxu0 0.0
      %278 = vmatprep.subr.mxu0 0.0
      %279 = vmatpush1.msra.mxu0 %v236
      %280 = vmatprep.subr.mxu0 0.0
      %281 = vmatpush1.msra.mxu0 %v235
      %282 = vmatprep.subr.mxu0 0.0
      %283 = vmatpush1.msra.mxu0 %v234
      %284 = vmatprep.subr.mxu0 0.0
      %285 = vmatpush1.msra.mxu0 %v233
      %286 = vmatprep.subr.mxu0 0.0
      %287 = vmatpush1.msra.mxu0 %v232
      %288 = vmatprep.subr.mxu0 0.0
      %289 = vmatpush1.msra.mxu0 %v231
      %290 = vmatprep.subr.mxu0 0.0
      %291 = vmatpush1.msra.mxu0 %v230
      %292 = vmatprep.subr.mxu0 0.0
      %293 = vmatpush1.msra.mxu0 %v229
      %294 = vmatprep.subr.mxu0 0.0
      %295 = vmatpush2.msra.mxu0 0.0
      %296 = vmatprep.subr.mxu0 0.0
      %297 = vmatpush2.msra.mxu0 0.0
      %298 = vmatprep.subr.mxu0 0.0
      %299 = vmatpush2.msra.mxu0 0.0
      %300 = vmatprep.subr.mxu0 0.0
      %301 = vmatpush2.msra.mxu0 0.0
      %302 = vmatprep.subr.mxu0 0.0
      %303 = vmatpush2.msra.mxu0 0.0
      %304 = vmatprep.subr.mxu0 0.0
      %305 = vmatpush2.msra.mxu0 0.0
      %306 = vmatprep.subr.mxu0 0.0
      %307 = vmatpush2.msra.mxu0 0.0
      %308 = vmatprep.subr.mxu0 0.0
      %309 = vmatpush2.msra.mxu0 0.0
      %310 = vmatprep.subr.mxu0 0.0
      %311 = vmatpush2.msra.mxu0 0.0
      %312 = vmatprep.subr.mxu0 0.0
      %313 = vmatpush2.msra.mxu0 0.0
      %314 = vmatprep.subr.mxu0 0.0
      %315 = vmatpush2.msra.mxu0 0.0
      %316 = vmatprep.subr.mxu0 0.0
      %317 = vmatpush2.msra.mxu0 0.0
      %318 = vmatprep.subr.mxu0 0.0
      %319 = vmatpush2.msra.mxu0 0.0
      %320 = vmatprep.subr.mxu0 0.0
      %321 = vmatpush2.msra.mxu0 0.0
      %322 = vmatprep.subr.mxu0 0.0
      %323 = vmatpush2.msra.mxu0 0.0
      %324 = vmatprep.subr.mxu0 0.0
      %325 = vmatpush2.msra.mxu0 0.0
      %326 = vmatprep.mubr.f32.mxu0 0.0
      %327 = vmatmul.mubr.f32.gmra.mxu0 %v239
      %v328 = vpop.f32.mrf.mxu0
      %v329 = vadd.f32 0.0, %v328
      %v330 = vpop.f32.mrf.mxu0
      %331 = vmatprep.mubr.f32.mxu0 0.0
      %332 = vmatmul.mubr.f32.gmra.mxu0 %v242
      %v333 = vpop.f32.mrf.mxu0
      %v334 = vadd.f32 0.0, %v333
      %v335 = vpop.f32.mrf.mxu0
      %336 = vmatprep.mubr.f32.mxu0 0.0
      %337 = vmatmul.mubr.f32.gmra.mxu0 %v245
      %v338 = vpop.f32.mrf.mxu0
      %v339 = vadd.f32 0.0, %v338
      %v340 = vpop.f32.mrf.mxu0
      %341 = vmatprep.mubr.f32.mxu0 0.0
      %342 = vmatmul.mubr.f32.gmra.mxu0 %v248
      %v343 = vpop.f32.mrf.mxu0
      %v344 = vadd.f32 0.0, %v343
      %v345 = vpop.f32.mrf.mxu0
      %346 = vmatprep.mubr.f32.mxu0 0.0
      %347 = vmatmul.mubr.f32.gmra.mxu0 %v251
      %v348 = vpop.f32.mrf.mxu0
      %v349 = vadd.f32 0.0, %v348
      %v350 = vpop.f32.mrf.mxu0
      %351 = vmatprep.mubr.f32.mxu0 0.0
      %352 = vmatmul.mubr.f32.gmra.mxu0 %v254
      %v353 = vpop.f32.mrf.mxu0
      %v354 = vadd.f32 0.0, %v353
      %v355 = vpop.f32.mrf.mxu0
      %356 = vmatprep.mubr.f32.mxu0 0.0
      %357 = vmatmul.mubr.f32.gmra.mxu0 %v257
      %v358 = vpop.f32.mrf.mxu0
      %v359 = vadd.f32 0.0, %v358
      %v360 = vpop.f32.mrf.mxu0
      %361 = vmatprep.mubr.f32.mxu0 0.0
      %362 = vmatmul.mubr.f32.gmra.mxu0 %v260
      %v363 = vpop.f32.mrf.mxu0
      %v364 = vadd.f32 0.0, %v363
      %v365 = vpop.f32.mrf.mxu0
      %366 = vdwg.mxu0
      %367 = vst.msk [vmem:[%s215] sm:$0xff] %vm237, %v329
      %368 = vst.msk [vmem:[%s215 + $0x8] sm:$0xff] %vm237, %v334
      %369 = vst.msk [vmem:[%s215 + $0x10] sm:$0xff] %vm237, %v339
      %370 = vst.msk [vmem:[%s215 + $0x18] sm:$0xff] %vm237, %v344
      %371 = vst.msk [vmem:[%s215 + $0x20] sm:$0xff] %vm237, %v349
      %372 = vst.msk [vmem:[%s215 + $0x28] sm:$0xff] %vm237, %v354
      %373 = vst.msk [vmem:[%s215 + $0x30] sm:$0xff] %vm237, %v359
      %374 = vst.msk [vmem:[%s215 + $0x38] sm:$0xff] %vm237, %v364
      %p375 = scmp.eq.s32.totalorder %s20, 0
      // Predicated region
      $region29: #{encoder_forward.2} parent=27 // pred_check
        %p376 = pneg %p375
      $region30: #{encoder_forward.2} parent=27 // pred_check_branch
        %378 = sbr.rel (%p376) target = $region32
      $region31: #{encoder_forward.2} parent=27 // pred_region
        %vm379 = vcmask 517120
        %380 = vst.msk [vmem:[%s220] sm:$0x3] %vm379, 0.0
      $region32: #{encoder_forward.2} parent=27 // pred_fallthru
        _
      %v381 = vsel %vm237, %v329, 0.0
      %v382 = vsel %vm237, %v334, 0.0
      %v383 = vadd.f32 %v381, %v382
      %v384 = vsel %vm237, %v339, 0.0
      %v385 = vadd.f32 %v383, %v384
      %v386 = vsel %vm237, %v344, 0.0
      %v387 = vadd.f32 %v385, %v386
      %v388 = vsel %vm237, %v349, 0.0
      %v389 = vadd.f32 %v387, %v388
      %v390 = vsel %vm237, %v354, 0.0
      %v391 = vadd.f32 %v389, %v390
      %v392 = vsel %vm237, %v359, 0.0
      %v393 = vadd.f32 %v391, %v392
      %v394 = vsel %vm237, %v364, 0.0
      %v395 = vadd.f32 %v393, %v394
      %v396 = vrot.slane %v395, 4
      %v397 = vadd.f32 %v395, %v396
      %v398 = vrot.slane %v397, 2
      %v399 = vadd.f32 %v397, %v398
      %v400 = vrot.slane %v399, 1
      %v401 = vadd.f32 %v399, %v400
      %v402 = vmul.f32 %v329, %v329
      %v403 = vmul.f32 %v334, %v334
      %v404 = vmul.f32 %v339, %v339
      %v405 = vmul.f32 %v344, %v344
      %v406 = vmul.f32 %v349, %v349
      %v407 = vmul.f32 %v354, %v354
      %v408 = vmul.f32 %v359, %v359
      %v409 = vmul.f32 %v364, %v364
      %v410 = vsel %vm237, %v402, 0.0
      %v411 = vsel %vm237, %v403, 0.0
      %v412 = vadd.f32 %v410, %v411
      %v413 = vsel %vm237, %v404, 0.0
      %v414 = vadd.f32 %v412, %v413
      %v415 = vsel %vm237, %v405, 0.0
      %v416 = vadd.f32 %v414, %v415
      %v417 = vsel %vm237, %v406, 0.0
      %v418 = vadd.f32 %v416, %v417
      %v419 = vsel %vm237, %v407, 0.0
      %v420 = vadd.f32 %v418, %v419
      %v421 = vsel %vm237, %v408, 0.0
      %v422 = vadd.f32 %v420, %v421
      %v423 = vsel %vm237, %v409, 0.0
      %v424 = vadd.f32 %v422, %v423
      %v425 = vrot.slane %v424, 4
      %v426 = vadd.f32 %v424, %v425
      %v427 = vrot.slane %v426, 2
      %v428 = vadd.f32 %v426, %v427
      %v429 = vrot.slane %v428, 1
      %v430 = vadd.f32 %v428, %v429
      %v431 = vld [vmem:[%s220] sm:$0x3]
      %vm432 = vcmask 1040384
      %v433 = vsel %vm432, %v401, %v430
      %v434 = vadd.f32 %v431, %v433
      %vm435 = vcmask 517120
      %436 = vst.msk [vmem:[%s220] sm:$0x3] %vm435, %v434
      %s437 = smul.u32 8, %s20
      %p438 = scmp.lt.s32.totalorder %s19, 1
      %s439 = scalar_select %p438, %s19, 1
      %p440 = scmp.lt.s32.totalorder %s437, 7
      %s441 = scalar_select %p440, %s437, 7
      %s442 = smul.addr %s439, 8
      %s443 = sadd.s32 %s441, %s442
      %s444 = smul.addr %s443, 8
      %s445 = scalar_lea.vmem %s2, %s444
      %p446 = scmp.lt.s32.totalorder %s19, 1
      %s447 = scalar_select %p446, %s19, 1
      %s448 = smul.addr %s447, 2
      %s449 = scalar_lea.vmem %s3, %s448
      // Predicated region
      $region33: #{encoder_forward.2} parent=27 // pred_check
        %p450 = pneg %p96
      $region34: #{encoder_forward.2} parent=27 // pred_check_branch
        %452 = sbr.rel (%p450) target = $region36
      $region35: #{encoder_forward.2} parent=27 // pred_region
        %s453 = smul.u32 8, %s20
      $region36: #{encoder_forward.2} parent=27 // pred_fallthru
        _
      // Predicated region
      $region37: #{encoder_forward.2} parent=27 // pred_check
        %p454 = pneg %p122
      $region38: #{encoder_forward.2} parent=27 // pred_check_branch
        %456 = sbr.rel (%p454) target = $region40
      $region39: #{encoder_forward.2} parent=27 // pred_region
        _
      $region40: #{encoder_forward.2} parent=27 // pred_fallthru
        _
    $region28: #{encoder_forward.2} parent=5 // pred_fallthru
      _
    %p457 = scmp.le.s32.totalorder 2, %s10
    // Predicated region
    $region41: #{encoder_forward.2} parent=5 // pred_check
      %p458 = pneg %p457
    $region42: #{encoder_forward.2} parent=5 // pred_check_branch
      %460 = sbr.rel (%p458) target = $region44
    $region43: #{encoder_forward.2} parent=5 // pred_region
      %s461 = ssub.s32 %s10, 2
      // Predicated region
      $region45: #{encoder_forward.2} parent=43 // pred_check
        %p462 = pneg %p102
      $region46: #{encoder_forward.2} parent=43 // pred_check_branch
        %464 = sbr.rel (%p462) target = $region48
      $region47: #{encoder_forward.2} parent=43 // pred_region
        %s465 = smul.u32 8, %s22
        %p466 = scmp.lt.s32.totalorder %s21, 1
        %s467 = scalar_select %p466, %s21, 1
        %p468 = scmp.lt.s32.totalorder %s465, 7
        %s469 = scalar_select %p468, %s465, 7
        %s470 = smul.addr %s467, 8
        %s471 = sadd.s32 %s469, %s470
        %s472 = smul.addr %s471, 8
        %s473 = scalar_lea.vmem %s2, %s472
      $region48: #{encoder_forward.2} parent=43 // pred_fallthru
        _
      // Predicated region
      $region49: #{encoder_forward.2} parent=43 // pred_check
        %p474 = pneg %p128
      $region50: #{encoder_forward.2} parent=43 // pred_check_branch
        %476 = sbr.rel (%p474) target = $region52
      $region51: #{encoder_forward.2} parent=43 // pred_region
        %p477 = scmp.lt.s32.totalorder %s21, 1
        %s478 = scalar_select %p477, %s21, 1
        %s479 = smul.addr %s478, 2
        %s480 = scalar_lea.vmem %s3, %s479
      $region52: #{encoder_forward.2} parent=43 // pred_fallthru
        _
    $region44: #{encoder_forward.2} parent=5 // pred_fallthru
      _
  $region6: #{encoder_forward.2} parent=0 // loop_footer
    %s14 = sadd.s32 1, %s10
  $region7: #{encoder_forward.2} parent=0 // loop_footer_branch
    %9 = sbr.rel target = $region3
  $region8: #{encoder_forward.2} parent=0 // loop_exit
    _

// kernel: encoder_forward.3
$region0: #{encoder_forward.3}
  #allocation0 [shape = 'u32[]', space=smem, size = 0x4, offset = 0x4, fixed_abs, tag = 'smem constant byte address 0x4 - core index']
  #allocation1 [shape = 'u32[144,128]{1,0:T(1,128)}', space=vmem, size = 0x12000, scoped, tag = 'internal scratch']
  #allocation2 [shape = 'f32[8,128]{1,0:T(8,128)}', space=vmem, size = 0x1000, scoped, tag = 'scratch operand']
  %s0 = inlined_call_operand.vmem [shape: f32[8,4096], index: 0, kind: input, shape index: {}]
  %s1 = inlined_call_operand.vmem [shape: f32[1,4096], index: 1, kind: input, shape index: {}]
  %s2 = inlined_call_operand.vmem [shape: f32[1,4096], index: 2, kind: input, shape index: {}]
  %s3 = inlined_call_operand.vmem [shape: f32[4096,128], index: 3, kind: input, shape index: {}]
  %s4 = inlined_call_operand.vmem [shape: f32[1,128], index: 4, kind: input, shape index: {}]
  %s5 = inlined_call_operand.vmem [shape: f32[128,128], index: 5, kind: input, shape index: {}]
  %s6 = inlined_call_operand.vmem [shape: f32[1,128], index: 6, kind: input, shape index: {}]
  %s7 = inlined_call_operand.vmem [shape: f32[8,128], index: 7, kind: output, shape index: {}]
  %s8 = sld [smem:[#allocation0]]
  $region69: #{encoder_forward.3} parent=0
    _
  %s10 = ssub.s32 1, %s8
  %s11 = scalar_select 0, %s10, %s8
  loop: start=0, step=1, limit=4
  $region2: #{encoder_forward.3} parent=0 // loop_pre_header
    _
  $region3: #{encoder_forward.3} parent=0 // loop_header
    %s13 = sphi 0, %s17
    %p14 = scmp.ge.s32.totalorder %s13, 4
    %s20 = sphi 0, %s32
    %s21 = sphi 0, %s28
    %s22 = sphi 0, %s20
    %s23 = sphi 0, %s21
    %s24 = sphi 0, %s22
    %s25 = sphi 0, %s23
    %s37 = sphi 0, %s39
    %s40 = sphi 0, %s37
    %s41 = sphi 0, %s40
    %s57 = sphi 0, %s41
    %s63 = sphi 0, %s65
    %s66 = sphi 0, %s63
    %s67 = sphi 0, %s66
    %s83 = sphi 0, %s67
    %s89 = sphi 0, %s91
    %s92 = sphi 0, %s89
    %s93 = sphi 0, %s92
    %s109 = sphi 0, %s93
    %s115 = sphi 0, %s117
    %s118 = sphi 0, %s115
    %s119 = sphi 0, %s118
    %s135 = sphi 0, %s119
    %s139 = sphi 0, %s139
    %s141 = sphi 0, %s139
    %s142 = sphi 0, %s141
    %s156 = sphi 0, %s142
    %s160 = sphi 0, %s160
    %s162 = sphi 0, %s160
    %s163 = sphi 0, %s162
    %s177 = sphi 0, %s163
    %s181 = sphi 0, %s181
    %s183 = sphi 0, %s181
    %s184 = sphi 0, %s183
    %s198 = sphi 0, %s184
    %s204 = sphi 0, %s206
    %s207 = sphi 0, %s204
    %s208 = sphi 0, %s207
    %s224 = sphi 0, %s208
  $region4: #{encoder_forward.3} parent=0 // loop_header_branch
    %16 = sbr.rel (%p14) target = $region8
  $region5: #{encoder_forward.3} parent=0 // loop_body
    %s18 = ssub.s32 %s13, 1
    %s19 = ssub.s32 %s13, 2
    %s26 = sadd.s32 1, %s21
    %p27 = scmp.ge.s32.totalorder %s26, 2
    %s28 = scalar_select %p27, 0, %s26
    %s29 = sadd.s32 1, %s20
    %s30 = scalar_select %p27, %s29, %s20
    %p31 = scmp.ge.s32.totalorder %s30, 1
    %s32 = scalar_select %p31, 0, %s30
    %s33 = ssub.s32 %s20, %s32
    %s34 = ssub.s32 %s21, %s28
    %s35 = sor.u32 %s33, %s34
    %p36 = scmp.eq.s32.totalorder %s35, 0
    %s38 = sadd.s32 %s37, 1
    %s39 = scalar_select %p36, %s37, %s38
    %p42 = pneg %p36
    %p43 = scmp.eq.s32.totalorder %s13, 1
    %p44 = por %p42, %p43
    %p45 = scmp.ne.s32.totalorder %s37, %s40
    %p46 = scmp.eq.s32.totalorder %s13, 0
    %p47 = por %p45, %p46
    %p48 = scmp.ne.s32.totalorder %s37, %s40
    %p49 = scmp.eq.s32.totalorder %s18, 1
    %p50 = por %p48, %p49
    %p51 = scmp.ne.s32.totalorder %s40, %s41
    %p52 = scmp.eq.s32.totalorder %s18, 0
    %p53 = por %p51, %p52
    %p54 = scmp.ne.s32.totalorder %s40, %s41
    %p55 = scmp.eq.s32.totalorder %s19, 1
    %p56 = por %p54, %p55
    %p58 = scmp.ne.s32.totalorder %s41, %s57
    %p59 = scmp.eq.s32.totalorder %s19, 0
    %p60 = por %p58, %p59
    %s61 = ssub.s32 %s21, %s28
    %p62 = scmp.eq.s32.totalorder %s61, 0
    %s64 = sadd.s32 %s63, 1
    %s65 = scalar_select %p62, %s63, %s64
    %p68 = pneg %p62
    %p69 = scmp.eq.s32.totalorder %s13, 1
    %p70 = por %p68, %p69
    %p71 = scmp.ne.s32.totalorder %s63, %s66
    %p72 = scmp.eq.s32.totalorder %s13, 0
    %p73 = por %p71, %p72
    %p74 = scmp.ne.s32.totalorder %s63, %s66
    %p75 = scmp.eq.s32.totalorder %s18, 1
    %p76 = por %p74, %p75
    %p77 = scmp.ne.s32.totalorder %s66, %s67
    %p78 = scmp.eq.s32.totalorder %s18, 0
    %p79 = por %p77, %p78
    %p80 = scmp.ne.s32.totalorder %s66, %s67
    %p81 = scmp.eq.s32.totalorder %s19, 1
    %p82 = por %p80, %p81
    %p84 = scmp.ne.s32.totalorder %s67, %s83
    %p85 = scmp.eq.s32.totalorder %s19, 0
    %p86 = por %p84, %p85
    %s87 = ssub.s32 %s21, %s28
    %p88 = scmp.eq.s32.totalorder %s87, 0
    %s90 = sadd.s32 %s89, 1
    %s91 = scalar_select %p88, %s89, %s90
    %p94 = pneg %p88
    %p95 = scmp.eq.s32.totalorder %s13, 1
    %p96 = por %p94, %p95
    %p97 = scmp.ne.s32.totalorder %s89, %s92
    %p98 = scmp.eq.s32.totalorder %s13, 0
    %p99 = por %p97, %p98
    %p100 = scmp.ne.s32.totalorder %s89, %s92
    %p101 = scmp.eq.s32.totalorder %s18, 1
    %p102 = por %p100, %p101
    %p103 = scmp.ne.s32.totalorder %s92, %s93
    %p104 = scmp.eq.s32.totalorder %s18, 0
    %p105 = por %p103, %p104
    %p106 = scmp.ne.s32.totalorder %s92, %s93
    %p107 = scmp.eq.s32.totalorder %s19, 1
    %p108 = por %p106, %p107
    %p110 = scmp.ne.s32.totalorder %s93, %s109
    %p111 = scmp.eq.s32.totalorder %s19, 0
    %p112 = por %p110, %p111
    %s113 = ssub.s32 %s21, %s28
    %p114 = scmp.eq.s32.totalorder %s113, 0
    %s116 = sadd.s32 %s115, 1
    %s117 = scalar_select %p114, %s115, %s116
    %p120 = pneg %p114
    %p121 = scmp.eq.s32.totalorder %s13, 1
    %p122 = por %p120, %p121
    %p123 = scmp.ne.s32.totalorder %s115, %s118
    %p124 = scmp.eq.s32.totalorder %s13, 0
    %p125 = por %p123, %p124
    %p126 = scmp.ne.s32.totalorder %s115, %s118
    %p127 = scmp.eq.s32.totalorder %s18, 1
    %p128 = por %p126, %p127
    %p129 = scmp.ne.s32.totalorder %s118, %s119
    %p130 = scmp.eq.s32.totalorder %s18, 0
    %p131 = por %p129, %p130
    %p132 = scmp.ne.s32.totalorder %s118, %s119
    %p133 = scmp.eq.s32.totalorder %s19, 1
    %p134 = por %p132, %p133
    %p136 = scmp.ne.s32.totalorder %s119, %s135
    %p137 = scmp.eq.s32.totalorder %s19, 0
    %p138 = por %p136, %p137
    %s140 = sadd.s32 %s139, 1
    %p143 = scmp.eq.s32.totalorder %s13, 1
    %p144 = scmp.ne.s32.totalorder %s139, %s141
    %p145 = scmp.eq.s32.totalorder %s13, 0
    %p146 = por %p144, %p145
    %p147 = scmp.ne.s32.totalorder %s139, %s141
    %p148 = scmp.eq.s32.totalorder %s18, 1
    %p149 = por %p147, %p148
    %p150 = scmp.ne.s32.totalorder %s141, %s142
    %p151 = scmp.eq.s32.totalorder %s18, 0
    %p152 = por %p150, %p151
    %p153 = scmp.ne.s32.totalorder %s141, %s142
    %p154 = scmp.eq.s32.totalorder %s19, 1
    %p155 = por %p153, %p154
    %p157 = scmp.ne.s32.totalorder %s142, %s156
    %p158 = scmp.eq.s32.totalorder %s19, 0
    %p159 = por %p157, %p158
    %s161 = sadd.s32 %s160, 1
    %p164 = scmp.eq.s32.totalorder %s13, 1
    %p165 = scmp.ne.s32.totalorder %s160, %s162
    %p166 = scmp.eq.s32.totalorder %s13, 0
    %p167 = por %p165, %p166
    %p168 = scmp.ne.s32.totalorder %s160, %s162
    %p169 = scmp.eq.s32.totalorder %s18, 1
    %p170 = por %p168, %p169
    %p171 = scmp.ne.s32.totalorder %s162, %s163
    %p172 = scmp.eq.s32.totalorder %s18, 0
    %p173 = por %p171, %p172
    %p174 = scmp.ne.s32.totalorder %s162, %s163
    %p175 = scmp.eq.s32.totalorder %s19, 1
    %p176 = por %p174, %p175
    %p178 = scmp.ne.s32.totalorder %s163, %s177
    %p179 = scmp.eq.s32.totalorder %s19, 0
    %p180 = por %p178, %p179
    %s182 = sadd.s32 %s181, 1
    %p185 = scmp.eq.s32.totalorder %s13, 1
    %p186 = scmp.ne.s32.totalorder %s181, %s183
    %p187 = scmp.eq.s32.totalorder %s13, 0
    %p188 = por %p186, %p187
    %p189 = scmp.ne.s32.totalorder %s181, %s183
    %p190 = scmp.eq.s32.totalorder %s18, 1
    %p191 = por %p189, %p190
    %p192 = scmp.ne.s32.totalorder %s183, %s184
    %p193 = scmp.eq.s32.totalorder %s18, 0
    %p194 = por %p192, %p193
    %p195 = scmp.ne.s32.totalorder %s183, %s184
    %p196 = scmp.eq.s32.totalorder %s19, 1
    %p197 = por %p195, %p196
    %p199 = scmp.ne.s32.totalorder %s184, %s198
    %p200 = scmp.eq.s32.totalorder %s19, 0
    %p201 = por %p199, %p200
    %s202 = ssub.s32 %s20, %s32
    %p203 = scmp.eq.s32.totalorder %s202, 0
    %s205 = sadd.s32 %s204, 1
    %s206 = scalar_select %p203, %s204, %s205
    %p209 = pneg %p203
    %p210 = scmp.eq.s32.totalorder %s13, 1
    %p211 = por %p209, %p210
    %p212 = scmp.ne.s32.totalorder %s204, %s207
    %p213 = scmp.eq.s32.totalorder %s13, 0
    %p214 = por %p212, %p213
    %p215 = scmp.ne.s32.totalorder %s204, %s207
    %p216 = scmp.eq.s32.totalorder %s18, 1
    %p217 = por %p215, %p216
    %p218 = scmp.ne.s32.totalorder %s207, %s208
    %p219 = scmp.eq.s32.totalorder %s18, 0
    %p220 = por %p218, %p219
    %p221 = scmp.ne.s32.totalorder %s207, %s208
    %p222 = scmp.eq.s32.totalorder %s19, 1
    %p223 = por %p221, %p222
    %p225 = scmp.ne.s32.totalorder %s208, %s224
    %p226 = scmp.eq.s32.totalorder %s19, 0
    %p227 = por %p225, %p226
    %p228 = scmp.le.s32.totalorder 1, %s13
    %p229 = scmp.lt.s32.totalorder %s13, 3
    %p230 = pnand %p228, %p229
    %p231 = pneg %p230
    // Predicated region
    $region9: #{encoder_forward.3} parent=5 // pred_check
      _
    $region10: #{encoder_forward.3} parent=5 // pred_check_branch
      %233 = sbr.rel (%p230) target = $region12
    $region11: #{encoder_forward.3} parent=5 // pred_region
      %s234 = ssub.s32 %s13, 1
      // Predicated region
      $region13: #{encoder_forward.3} parent=11 // pred_check
        %p235 = pneg %p152
      $region14: #{encoder_forward.3} parent=11 // pred_check_branch
        %237 = sbr.rel (%p235) target = $region16
      $region15: #{encoder_forward.3} parent=11 // pred_region
        _
      $region16: #{encoder_forward.3} parent=11 // pred_fallthru
        _
      // Predicated region
      $region17: #{encoder_forward.3} parent=11 // pred_check
        %p238 = pneg %p173
      $region18: #{encoder_forward.3} parent=11 // pred_check_branch
        %240 = sbr.rel (%p238) target = $region20
      $region19: #{encoder_forward.3} parent=11 // pred_region
        _
      $region20: #{encoder_forward.3} parent=11 // pred_fallthru
        _
      // Predicated region
      $region21: #{encoder_forward.3} parent=11 // pred_check
        %p241 = pneg %p194
      $region22: #{encoder_forward.3} parent=11 // pred_check_branch
        %243 = sbr.rel (%p241) target = $region24
      $region23: #{encoder_forward.3} parent=11 // pred_region
        _
      $region24: #{encoder_forward.3} parent=11 // pred_fallthru
        _
    $region12: #{encoder_forward.3} parent=5 // pred_fallthru
      _
    %p244 = scmp.lt.s32.totalorder %s13, 2
    // Predicated region
    $region25: #{encoder_forward.3} parent=5 // pred_check
      %p245 = pneg %p244
    $region26: #{encoder_forward.3} parent=5 // pred_check_branch
      %247 = sbr.rel (%p245) target = $region28
    $region27: #{encoder_forward.3} parent=5 // pred_region
      // Predicated region
      $region29: #{encoder_forward.3} parent=27 // pred_check
        %p248 = pneg %p47
      $region30: #{encoder_forward.3} parent=27 // pred_check_branch
        %250 = sbr.rel (%p248) target = $region32
      $region31: #{encoder_forward.3} parent=27 // pred_region
        %s251 = smul.u32 16, %s21
        %p252 = scmp.lt.s32.totalorder %s20, 0
        %s253 = scalar_select %p252, %s20, 0
        %p254 = scmp.lt.s32.totalorder %s251, 31
        %s255 = scalar_select %p254, %s251, 31
        %s256 = smul.addr %s253, 32
        %s257 = sadd.s32 %s255, %s256
        %s258 = smul.addr %s257, 8
        %s259 = scalar_lea.vmem %s0, %s258
        %s260 = smul.u32 16, %s21
      $region32: #{encoder_forward.3} parent=27 // pred_fallthru
        _
      // Predicated region
      $region33: #{encoder_forward.3} parent=27 // pred_check
        %p261 = pneg %p73
      $region34: #{encoder_forward.3} parent=27 // pred_check_branch
        %263 = sbr.rel (%p261) target = $region36
      $region35: #{encoder_forward.3} parent=27 // pred_region
        %s264 = smul.u32 16, %s21
        %p265 = scmp.lt.s32.totalorder %s264, 31
        %s266 = scalar_select %p265, %s264, 31
        %s267 = scalar_lea.vmem %s1, %s266
        %s268 = smul.u32 16, %s21
      $region36: #{encoder_forward.3} parent=27 // pred_fallthru
        _
      // Predicated region
      $region37: #{encoder_forward.3} parent=27 // pred_check
        %p269 = pneg %p99
      $region38: #{encoder_forward.3} parent=27 // pred_check_branch
        %271 = sbr.rel (%p269) target = $region40
      $region39: #{encoder_forward.3} parent=27 // pred_region
        %s272 = smul.u32 16, %s21
        %p273 = scmp.lt.s32.totalorder %s272, 31
        %s274 = scalar_select %p273, %s272, 31
        %s275 = scalar_lea.vmem %s2, %s274
        %s276 = smul.u32 16, %s21
      $region40: #{encoder_forward.3} parent=27 // pred_fallthru
        _
      // Predicated region
      $region41: #{encoder_forward.3} parent=27 // pred_check
        %p277 = pneg %p125
      $region42: #{encoder_forward.3} parent=27 // pred_check_branch
        %279 = sbr.rel (%p277) target = $region44
      $region43: #{encoder_forward.3} parent=27 // pred_region
        %s280 = smul.u32 256, %s21
        %p281 = scmp.lt.s32.totalorder %s280, 511
        %s282 = scalar_select %p281, %s280, 511
        %s283 = smul.addr %s282, 8
        %s284 = scalar_lea.vmem %s3, %s283
        %s285 = smul.u32 256, %s21
      $region44: #{encoder_forward.3} parent=27 // pred_fallthru
        _
    $region28: #{encoder_forward.3} parent=5 // pred_fallthru
      _
    %p286 = scmp.le.s32.totalorder 1, %s13
    %p287 = scmp.lt.s32.totalorder %s13, 3
    %p288 = pnand %p286, %p287
    %p289 = pneg %p288
    // Predicated region
    $region45: #{encoder_forward.3} parent=5 // pred_check
      _
    $region46: #{encoder_forward.3} parent=5 // pred_check_branch
      %291 = sbr.rel (%p288) target = $region48
    $region47: #{encoder_forward.3} parent=5 // pred_region
      %s292 = ssub.s32 %s13, 1
      %s293 = smul.u32 16, %s23
      %p294 = scmp.lt.s32.totalorder %s22, 0
      %s295 = scalar_select %p294, %s22, 0
      %p296 = scmp.lt.s32.totalorder %s293, 31
      %s297 = scalar_select %p296, %s293, 31
      %s298 = smul.addr %s295, 32
      %s299 = sadd.s32 %s297, %s298
      %s300 = smul.addr %s299, 8
      %s301 = scalar_lea.vmem %s0, %s300
      %p302 = pneg %p53
      %p303 = pneg %p50
      %s304 = smul.u32 16, %s23
      %p305 = scmp.lt.s32.totalorder %s304, 31
      %s306 = scalar_select %p305, %s304, 31
      %s307 = scalar_lea.vmem %s1, %s306
      %p308 = pneg %p79
      %p309 = pneg %p76
      %s310 = smul.u32 16, %s23
      %p311 = scmp.lt.s32.totalorder %s310, 31
      %s312 = scalar_select %p311, %s310, 31
      %s313 = scalar_lea.vmem %s2, %s312
      %p314 = pneg %p105
      %p315 = pneg %p102
      %s316 = smul.u32 256, %s23
      %p317 = scmp.lt.s32.totalorder %s316, 511
      %s318 = scalar_select %p317, %s316, 511
      %s319 = smul.addr %s318, 8
      %s320 = scalar_lea.vmem %s3, %s319
      %p321 = pneg %p131
      %p322 = pneg %p128
      %p323 = pneg %p152
      %p324 = pneg %p149
      %p325 = pneg %p173
      %p326 = pneg %p170
      %p327 = pneg %p194
      %p328 = pneg %p191
      %p329 = pneg %p220
      %p330 = pneg %p217
      %p331 = scmp.lt.s32.totalorder %s22, 0
      %s332 = scalar_select %p331, %s22, 0
      %s333 = smul.addr %s332, 8
      %s334 = scalar_lea.vmem %s7, %s333
      %s335 = smul.u32 16, %s23
      %p336 = scmp.lt.s32.totalorder %s22, 0
      %s337 = scalar_select %p336, %s22, 0
      %p338 = scmp.lt.s32.totalorder %s335, 31
      %s339 = scalar_select %p338, %s335, 31
      %s340 = smul.addr %s337, 32
      %s341 = sadd.s32 %s339, %s340
      %s342 = smul.addr %s341, 8
      %s343 = scalar_lea.vmem %s0, %s342
      %s344 = smul.u32 16, %s23
      %s345 = smul.u32 16, %s23
      %p346 = scmp.lt.s32.totalorder %s345, 31
      %s347 = scalar_select %p346, %s345, 31
      %s348 = scalar_lea.vmem %s1, %s347
      %s349 = smul.u32 16, %s23
      %s350 = smul.u32 16, %s23
      %p351 = scmp.lt.s32.totalorder %s350, 31
      %s352 = scalar_select %p351, %s350, 31
      %s353 = scalar_lea.vmem %s2, %s352
      %s354 = smul.u32 16, %s23
      %s355 = smul.u32 256, %s23
      %p356 = scmp.lt.s32.totalorder %s355, 511
      %s357 = scalar_select %p356, %s355, 511
      %s358 = smul.addr %s357, 8
      %s359 = scalar_lea.vmem %s3, %s358
      %s360 = smul.u32 256, %s23
      %p361 = scmp.lt.s32.totalorder %s22, 0
      %s362 = scalar_select %p361, %s22, 0
      %s363 = smul.addr %s362, 8
      %s364 = scalar_lea.vmem %s7, %s363
      %p365 = scmp.eq.s32.totalorder %s23, 0
      // Predicated region
      $region49: #{encoder_forward.3} parent=47 // pred_check
        %p366 = pneg %p365
      $region50: #{encoder_forward.3} parent=47 // pred_check_branch
        %368 = sbr.rel (%p366) target = $region52
      $region51: #{encoder_forward.3} parent=47 // pred_region
        %369 = vst [vmem:[#allocation2] sm:$0xff] 0.0
      $region52: #{encoder_forward.3} parent=47 // pred_fallthru
        _
      %v370 = vld [vmem:[%s343] sm:$0xff]
      %v371 = vld [vmem:[%s343 + $0x8] sm:$0xff]
      %v372 = vld [vmem:[%s343 + $0x10] sm:$0xff]
      %v373 = vld [vmem:[%s343 + $0x18] sm:$0xff]
      %v374 = vld [vmem:[%s343 + $0x20] sm:$0xff]
      %v375 = vld [vmem:[%s343 + $0x28] sm:$0xff]
      %v376 = vld [vmem:[%s343 + $0x30] sm:$0xff]
      %v377 = vld [vmem:[%s343 + $0x38] sm:$0xff]
      %v378 = vld [vmem:[%s343 + $0x40] sm:$0xff]
      %v379 = vld [vmem:[%s343 + $0x48] sm:$0xff]
      %v380 = vld [vmem:[%s343 + $0x50] sm:$0xff]
      %v381 = vld [vmem:[%s343 + $0x58] sm:$0xff]
      %v382 = vld [vmem:[%s343 + $0x60] sm:$0xff]
      %v383 = vld [vmem:[%s343 + $0x68] sm:$0xff]
      %v384 = vld [vmem:[%s343 + $0x70] sm:$0xff]
      %v385 = vld [vmem:[%s343 + $0x78] sm:$0xff]
      %v386 = vld [vmem:[%s348] sm:$0xff]
      %v387 = vld [vmem:[%s348 + $0x8] sm:$0xff]
      %v390 = vlaneseq
      %v391 = vshrl.u32 %v390, 7
      %v392 = vsub.s32 0, %v391
      %v393 = vrot.slane %v386, %v392
      %v394 = vlaneseq
      %v395 = vshrl.u32 %v394, 7
      %v396 = vsub.s32 1, %v395
      %v397 = vrot.slane %v386, %v396
      %v398 = vlaneseq
      %v399 = vshrl.u32 %v398, 7
      %v400 = vsub.s32 2, %v399
      %v401 = vrot.slane %v386, %v400
      %v402 = vlaneseq
      %v403 = vshrl.u32 %v402, 7
      %v404 = vsub.s32 3, %v403
      %v405 = vrot.slane %v386, %v404
      %v406 = vlaneseq
      %v407 = vshrl.u32 %v406, 7
      %v408 = vsub.s32 4, %v407
      %v409 = vrot.slane %v386, %v408
      %v410 = vlaneseq
      %v411 = vshrl.u32 %v410, 7
      %v412 = vsub.s32 5, %v411
      %v413 = vrot.slane %v386, %v412
      %v414 = vlaneseq
      %v415 = vshrl.u32 %v414, 7
      %v416 = vsub.s32 6, %v415
      %v417 = vrot.slane %v386, %v416
      %v418 = vlaneseq
      %v419 = vshrl.u32 %v418, 7
      %v420 = vsub.s32 7, %v419
      %v421 = vrot.slane %v386, %v420
      %v422 = vlaneseq
      %v423 = vshrl.u32 %v422, 7
      %v424 = vsub.s32 0, %v423
      %v425 = vrot.slane %v387, %v424
      %v426 = vlaneseq
      %v427 = vshrl.u32 %v426, 7
      %v428 = vsub.s32 1, %v427
      %v429 = vrot.slane %v387, %v428
      %v430 = vlaneseq
      %v431 = vshrl.u32 %v430, 7
      %v432 = vsub.s32 2, %v431
      %v433 = vrot.slane %v387, %v432
      %v434 = vlaneseq
      %v435 = vshrl.u32 %v434, 7
      %v436 = vsub.s32 3, %v435
      %v437 = vrot.slane %v387, %v436
      %v438 = vlaneseq
      %v439 = vshrl.u32 %v438, 7
      %v440 = vsub.s32 4, %v439
      %v441 = vrot.slane %v387, %v440
      %v442 = vlaneseq
      %v443 = vshrl.u32 %v442, 7
      %v444 = vsub.s32 5, %v443
      %v445 = vrot.slane %v387, %v444
      %v446 = vlaneseq
      %v447 = vshrl.u32 %v446, 7
      %v448 = vsub.s32 6, %v447
      %v449 = vrot.slane %v387, %v448
      %v450 = vlaneseq
      %v451 = vshrl.u32 %v450, 7
      %v452 = vsub.s32 7, %v451
      %v453 = vrot.slane %v387, %v452
      %v470 = vmul.f32 %v370, %v393
      %v471 = vmul.f32 %v371, %v397
      %v472 = vmul.f32 %v372, %v401
      %v473 = vmul.f32 %v373, %v405
      %v474 = vmul.f32 %v374, %v409
      %v475 = vmul.f32 %v375, %v413
      %v476 = vmul.f32 %v376, %v417
      %v477 = vmul.f32 %v377, %v421
      %v478 = vmul.f32 %v378, %v425
      %v479 = vmul.f32 %v379, %v429
      %v480 = vmul.f32 %v380, %v433
      %v481 = vmul.f32 %v381, %v437
      %v482 = vmul.f32 %v382, %v441
      %v483 = vmul.f32 %v383, %v445
      %v484 = vmul.f32 %v384, %v449
      %v485 = vmul.f32 %v385, %v453
      %v486 = vld [vmem:[%s353] sm:$0xff]
      %v487 = vld [vmem:[%s353 + $0x8] sm:$0xff]
      %v490 = vlaneseq
      %v491 = vshrl.u32 %v490, 7
      %v492 = vsub.s32 0, %v491
      %v493 = vrot.slane %v486, %v492
      %v494 = vlaneseq
      %v495 = vshrl.u32 %v494, 7
      %v496 = vsub.s32 1, %v495
      %v497 = vrot.slane %v486, %v496
      %v498 = vlaneseq
      %v499 = vshrl.u32 %v498, 7
      %v500 = vsub.s32 2, %v499
      %v501 = vrot.slane %v486, %v500
      %v502 = vlaneseq
      %v503 = vshrl.u32 %v502, 7
      %v504 = vsub.s32 3, %v503
      %v505 = vrot.slane %v486, %v504
      %v506 = vlaneseq
      %v507 = vshrl.u32 %v506, 7
      %v508 = vsub.s32 4, %v507
      %v509 = vrot.slane %v486, %v508
      %v510 = vlaneseq
      %v511 = vshrl.u32 %v510, 7
      %v512 = vsub.s32 5, %v511
      %v513 = vrot.slane %v486, %v512
      %v514 = vlaneseq
      %v515 = vshrl.u32 %v514, 7
      %v516 = vsub.s32 6, %v515
      %v517 = vrot.slane %v486, %v516
      %v518 = vlaneseq
      %v519 = vshrl.u32 %v518, 7
      %v520 = vsub.s32 7, %v519
      %v521 = vrot.slane %v486, %v520
      %v522 = vlaneseq
      %v523 = vshrl.u32 %v522, 7
      %v524 = vsub.s32 0, %v523
      %v525 = vrot.slane %v487, %v524
      %v526 = vlaneseq
      %v527 = vshrl.u32 %v526, 7
      %v528 = vsub.s32 1, %v527
      %v529 = vrot.slane %v487, %v528
      %v530 = vlaneseq
      %v531 = vshrl.u32 %v530, 7
      %v532 = vsub.s32 2, %v531
      %v533 = vrot.slane %v487, %v532
      %v534 = vlaneseq
      %v535 = vshrl.u32 %v534, 7
      %v536 = vsub.s32 3, %v535
      %v537 = vrot.slane %v487, %v536
      %v538 = vlaneseq
      %v539 = vshrl.u32 %v538, 7
      %v540 = vsub.s32 4, %v539
      %v541 = vrot.slane %v487, %v540
      %v542 = vlaneseq
      %v543 = vshrl.u32 %v542, 7
      %v544 = vsub.s32 5, %v543
      %v545 = vrot.slane %v487, %v544
      %v546 = vlaneseq
      %v547 = vshrl.u32 %v546, 7
      %v548 = vsub.s32 6, %v547
      %v549 = vrot.slane %v487, %v548
      %v550 = vlaneseq
      %v551 = vshrl.u32 %v550, 7
      %v552 = vsub.s32 7, %v551
      %v553 = vrot.slane %v487, %v552
      %v570 = vadd.f32 %v470, %v493
      %v571 = vadd.f32 %v471, %v497
      %v572 = vadd.f32 %v472, %v501
      %v573 = vadd.f32 %v473, %v505
      %v574 = vadd.f32 %v474, %v509
      %v575 = vadd.f32 %v475, %v513
      %v576 = vadd.f32 %v476, %v517
      %v577 = vadd.f32 %v477, %v521
      %v578 = vadd.f32 %v478, %v525
      %v579 = vadd.f32 %v479, %v529
      %v580 = vadd.f32 %v480, %v533
      %v581 = vadd.f32 %v481, %v537
      %v582 = vadd.f32 %v482, %v541
      %v583 = vadd.f32 %v483, %v545
      %v584 = vadd.f32 %v484, %v549
      %v585 = vadd.f32 %v485, %v553
      %v586 = vmax.f32 %v570, 0.0
      %v587 = vmax.f32 %v571, 0.0
      %v588 = vmax.f32 %v572, 0.0
      %v589 = vmax.f32 %v573, 0.0
      %v590 = vmax.f32 %v574, 0.0
      %v591 = vmax.f32 %v575, 0.0
      %v592 = vmax.f32 %v576, 0.0
      %v593 = vmax.f32 %v577, 0.0
      %v594 = vmax.f32 %v578, 0.0
      %v595 = vmax.f32 %v579, 0.0
      %v596 = vmax.f32 %v580, 0.0
      %v597 = vmax.f32 %v581, 0.0
      %v598 = vmax.f32 %v582, 0.0
      %v599 = vmax.f32 %v583, 0.0
      %v600 = vmax.f32 %v584, 0.0
      %v601 = vmax.f32 %v585, 0.0
      %v602 = vld [vmem:[#allocation2] sm:$0xff]
      %v603 = vld [vmem:[%s359] sm:$0xff]
      %v604 = vld [vmem:[%s359 + $0x8] sm:$0xff]
      %v605 = vld [vmem:[%s359 + $0x10] sm:$0xff]
      %v606 = vld [vmem:[%s359 + $0x18] sm:$0xff]
      %v607 = vld [vmem:[%s359 + $0x20] sm:$0xff]
      %v608 = vld [vmem:[%s359 + $0x28] sm:$0xff]
      %v609 = vld [vmem:[%s359 + $0x30] sm:$0xff]
      %v610 = vld [vmem:[%s359 + $0x38] sm:$0xff]
      %v611 = vld [vmem:[%s359 + $0x40] sm:$0xff]
      %v612 = vld [vmem:[%s359 + $0x48] sm:$0xff]
      %v613 = vld [vmem:[%s359 + $0x50] sm:$0xff]
      %v614 = vld [vmem:[%s359 + $0x58] sm:$0xff]
      %v615 = vld [vmem:[%s359 + $0x60] sm:$0xff]
      %v616 = vld [vmem:[%s359 + $0x68] sm:$0xff]
      %v617 = vld [vmem:[%s359 + $0x70] sm:$0xff]
      %v618 = vld [vmem:[%s359 + $0x78] sm:$0xff]
      %v619 = vld [vmem:[%s359 + $0x80] sm:$0xff]
      %v620 = vld [vmem:[%s359 + $0x88] sm:$0xff]
      %v621 = vld [vmem:[%s359 + $0x90] sm:$0xff]
      %v622 = vld [vmem:[%s359 + $0x98] sm:$0xff]
      %v623 = vld [vmem:[%s359 + $0xa0] sm:$0xff]
      %v624 = vld [vmem:[%s359 + $0xa8] sm:$0xff]
      %v625 = vld [vmem:[%s359 + $0xb0] sm:$0xff]
      %v626 = vld [vmem:[%s359 + $0xb8] sm:$0xff]
      %v627 = vld [vmem:[%s359 + $0xc0] sm:$0xff]
      %v628 = vld [vmem:[%s359 + $0xc8] sm:$0xff]
      %v629 = vld [vmem:[%s359 + $0xd0] sm:$0xff]
      %v630 = vld [vmem:[%s359 + $0xd8] sm:$0xff]
      %v631 = vld [vmem:[%s359 + $0xe0] sm:$0xff]
      %v632 = vld [vmem:[%s359 + $0xe8] sm:$0xff]
      %v633 = vld [vmem:[%s359 + $0xf0] sm:$0xff]
      %v634 = vld [vmem:[%s359 + $0xf8] sm:$0xff]
      %v635 = vld [vmem:[%s359 + $0x100] sm:$0xff]
      %v636 = vld [vmem:[%s359 + $0x108] sm:$0xff]
      %v637 = vld [vmem:[%s359 + $0x110] sm:$0xff]
      %v638 = vld [vmem:[%s359 + $0x118] sm:$0xff]
      %v639 = vld [vmem:[%s359 + $0x120] sm:$0xff]
      %v640 = vld [vmem:[%s359 + $0x128] sm:$0xff]
      %v641 = vld [vmem:[%s359 + $0x130] sm:$0xff]
      %v642 = vld [vmem:[%s359 + $0x138] sm:$0xff]
      %v643 = vld [vmem:[%s359 + $0x140] sm:$0xff]
      %v644 = vld [vmem:[%s359 + $0x148] sm:$0xff]
      %v645 = vld [vmem:[%s359 + $0x150] sm:$0xff]
      %v646 = vld [vmem:[%s359 + $0x158] sm:$0xff]
      %v647 = vld [vmem:[%s359 + $0x160] sm:$0xff]
      %v648 = vld [vmem:[%s359 + $0x168] sm:$0xff]
      %v649 = vld [vmem:[%s359 + $0x170] sm:$0xff]
      %v650 = vld [vmem:[%s359 + $0x178] sm:$0xff]
      %v651 = vld [vmem:[%s359 + $0x180] sm:$0xff]
      %v652 = vld [vmem:[%s359 + $0x188] sm:$0xff]
      %v653 = vld [vmem:[%s359 + $0x190] sm:$0xff]
      %v654 = vld [vmem:[%s359 + $0x198] sm:$0xff]
      %v655 = vld [vmem:[%s359 + $0x1a0] sm:$0xff]
      %v656 = vld [vmem:[%s359 + $0x1a8] sm:$0xff]
      %v657 = vld [vmem:[%s359 + $0x1b0] sm:$0xff]
      %v658 = vld [vmem:[%s359 + $0x1b8] sm:$0xff]
      %v659 = vld [vmem:[%s359 + $0x1c0] sm:$0xff]
      %v660 = vld [vmem:[%s359 + $0x1c8] sm:$0xff]
      %v661 = vld [vmem:[%s359 + $0x1d0] sm:$0xff]
      %v662 = vld [vmem:[%s359 + $0x1d8] sm:$0xff]
      %v663 = vld [vmem:[%s359 + $0x1e0] sm:$0xff]
      %v664 = vld [vmem:[%s359 + $0x1e8] sm:$0xff]
      %v665 = vld [vmem:[%s359 + $0x1f0] sm:$0xff]
      %v666 = vld [vmem:[%s359 + $0x1f8] sm:$0xff]
      %v667 = vld [vmem:[%s359 + $0x200] sm:$0xff]
      %v668 = vld [vmem:[%s359 + $0x208] sm:$0xff]
      %v669 = vld [vmem:[%s359 + $0x210] sm:$0xff]
      %v670 = vld [vmem:[%s359 + $0x218] sm:$0xff]
      %v671 = vld [vmem:[%s359 + $0x220] sm:$0xff]
      %v672 = vld [vmem:[%s359 + $0x228] sm:$0xff]
      %v673 = vld [vmem:[%s359 + $0x230] sm:$0xff]
      %v674 = vld [vmem:[%s359 + $0x238] sm:$0xff]
      %v675 = vld [vmem:[%s359 + $0x240] sm:$0xff]
      %v676 = vld [vmem:[%s359 + $0x248] sm:$0xff]
      %v677 = vld [vmem:[%s359 + $0x250] sm:$0xff]
      %v678 = vld [vmem:[%s359 + $0x258] sm:$0xff]
      %v679 = vld [vmem:[%s359 + $0x260] sm:$0xff]
      %v680 = vld [vmem:[%s359 + $0x268] sm:$0xff]
      %v681 = vld [vmem:[%s359 + $0x270] sm:$0xff]
      %v682 = vld [vmem:[%s359 + $0x278] sm:$0xff]
      %v683 = vld [vmem:[%s359 + $0x280] sm:$0xff]
      %v684 = vld [vmem:[%s359 + $0x288] sm:$0xff]
      %v685 = vld [vmem:[%s359 + $0x290] sm:$0xff]
      %v686 = vld [vmem:[%s359 + $0x298] sm:$0xff]
      %v687 = vld [vmem:[%s359 + $0x2a0] sm:$0xff]
      %v688 = vld [vmem:[%s359 + $0x2a8] sm:$0xff]
      %v689 = vld [vmem:[%s359 + $0x2b0] sm:$0xff]
      %v690 = vld [vmem:[%s359 + $0x2b8] sm:$0xff]
      %v691 = vld [vmem:[%s359 + $0x2c0] sm:$0xff]
      %v692 = vld [vmem:[%s359 + $0x2c8] sm:$0xff]
      %v693 = vld [vmem:[%s359 + $0x2d0] sm:$0xff]
      %v694 = vld [vmem:[%s359 + $0x2d8] sm:$0xff]
      %v695 = vld [vmem:[%s359 + $0x2e0] sm:$0xff]
      %v696 = vld [vmem:[%s359 + $0x2e8] sm:$0xff]
      %v697 = vld [vmem:[%s359 + $0x2f0] sm:$0xff]
      %v698 = vld [vmem:[%s359 + $0x2f8] sm:$0xff]
      %v699 = vld [vmem:[%s359 + $0x300] sm:$0xff]
      %v700 = vld [vmem:[%s359 + $0x308] sm:$0xff]
      %v701 = vld [vmem:[%s359 + $0x310] sm:$0xff]
      %v702 = vld [vmem:[%s359 + $0x318] sm:$0xff]
      %v703 = vld [vmem:[%s359 + $0x320] sm:$0xff]
      %v704 = vld [vmem:[%s359 + $0x328] sm:$0xff]
      %v705 = vld [vmem:[%s359 + $0x330] sm:$0xff]
      %v706 = vld [vmem:[%s359 + $0x338] sm:$0xff]
      %v707 = vld [vmem:[%s359 + $0x340] sm:$0xff]
      %v708 = vld [vmem:[%s359 + $0x348] sm:$0xff]
      %v709 = vld [vmem:[%s359 + $0x350] sm:$0xff]
      %v710 = vld [vmem:[%s359 + $0x358] sm:$0xff]
      %v711 = vld [vmem:[%s359 + $0x360] sm:$0xff]
      %v712 = vld [vmem:[%s359 + $0x368] sm:$0xff]
      %v713 = vld [vmem:[%s359 + $0x370] sm:$0xff]
      %v714 = vld [vmem:[%s359 + $0x378] sm:$0xff]
      %v715 = vld [vmem:[%s359 + $0x380] sm:$0xff]
      %v716 = vld [vmem:[%s359 + $0x388] sm:$0xff]
      %v717 = vld [vmem:[%s359 + $0x390] sm:$0xff]
      %v718 = vld [vmem:[%s359 + $0x398] sm:$0xff]
      %v719 = vld [vmem:[%s359 + $0x3a0] sm:$0xff]
      %v720 = vld [vmem:[%s359 + $0x3a8] sm:$0xff]
      %v721 = vld [vmem:[%s359 + $0x3b0] sm:$0xff]
      %v722 = vld [vmem:[%s359 + $0x3b8] sm:$0xff]
      %v723 = vld [vmem:[%s359 + $0x3c0] sm:$0xff]
      %v724 = vld [vmem:[%s359 + $0x3c8] sm:$0xff]
      %v725 = vld [vmem:[%s359 + $0x3d0] sm:$0xff]
      %v726 = vld [vmem:[%s359 + $0x3d8] sm:$0xff]
      %v727 = vld [vmem:[%s359 + $0x3e0] sm:$0xff]
      %v728 = vld [vmem:[%s359 + $0x3e8] sm:$0xff]
      %v729 = vld [vmem:[%s359 + $0x3f0] sm:$0xff]
      %v730 = vld [vmem:[%s359 + $0x3f8] sm:$0xff]
      %v731 = vld [vmem:[%s359 + $0x400] sm:$0xff]
      %v732 = vld [vmem:[%s359 + $0x408] sm:$0xff]
      %v733 = vld [vmem:[%s359 + $0x410] sm:$0xff]
      %v734 = vld [vmem:[%s359 + $0x418] sm:$0xff]
      %v735 = vld [vmem:[%s359 + $0x420] sm:$0xff]
      %v736 = vld [vmem:[%s359 + $0x428] sm:$0xff]
      %v737 = vld [vmem:[%s359 + $0x430] sm:$0xff]
      %v738 = vld [vmem:[%s359 + $0x438] sm:$0xff]
      %v739 = vld [vmem:[%s359 + $0x440] sm:$0xff]
      %v740 = vld [vmem:[%s359 + $0x448] sm:$0xff]
      %v741 = vld [vmem:[%s359 + $0x450] sm:$0xff]
      %v742 = vld [vmem:[%s359 + $0x458] sm:$0xff]
      %v743 = vld [vmem:[%s359 + $0x460] sm:$0xff]
      %v744 = vld [vmem:[%s359 + $0x468] sm:$0xff]
      %v745 = vld [vmem:[%s359 + $0x470] sm:$0xff]
      %v746 = vld [vmem:[%s359 + $0x478] sm:$0xff]
      %v747 = vld [vmem:[%s359 + $0x480] sm:$0xff]
      %v748 = vld [vmem:[%s359 + $0x488] sm:$0xff]
      %v749 = vld [vmem:[%s359 + $0x490] sm:$0xff]
      %v750 = vld [vmem:[%s359 + $0x498] sm:$0xff]
      %v751 = vld [vmem:[%s359 + $0x4a0] sm:$0xff]
      %v752 = vld [vmem:[%s359 + $0x4a8] sm:$0xff]
      %v753 = vld [vmem:[%s359 + $0x4b0] sm:$0xff]
      %v754 = vld [vmem:[%s359 + $0x4b8] sm:$0xff]
      %v755 = vld [vmem:[%s359 + $0x4c0] sm:$0xff]
      %v756 = vld [vmem:[%s359 + $0x4c8] sm:$0xff]
      %v757 = vld [vmem:[%s359 + $0x4d0] sm:$0xff]
      %v758 = vld [vmem:[%s359 + $0x4d8] sm:$0xff]
      %v759 = vld [vmem:[%s359 + $0x4e0] sm:$0xff]
      %v760 = vld [vmem:[%s359 + $0x4e8] sm:$0xff]
      %v761 = vld [vmem:[%s359 + $0x4f0] sm:$0xff]
      %v762 = vld [vmem:[%s359 + $0x4f8] sm:$0xff]
      %v763 = vld [vmem:[%s359 + $0x500] sm:$0xff]
      %v764 = vld [vmem:[%s359 + $0x508] sm:$0xff]
      %v765 = vld [vmem:[%s359 + $0x510] sm:$0xff]
      %v766 = vld [vmem:[%s359 + $0x518] sm:$0xff]
      %v767 = vld [vmem:[%s359 + $0x520] sm:$0xff]
      %v768 = vld [vmem:[%s359 + $0x528] sm:$0xff]
      %v769 = vld [vmem:[%s359 + $0x530] sm:$0xff]
      %v770 = vld [vmem:[%s359 + $0x538] sm:$0xff]
      %v771 = vld [vmem:[%s359 + $0x540] sm:$0xff]
      %v772 = vld [vmem:[%s359 + $0x548] sm:$0xff]
      %v773 = vld [vmem:[%s359 + $0x550] sm:$0xff]
      %v774 = vld [vmem:[%s359 + $0x558] sm:$0xff]
      %v775 = vld [vmem:[%s359 + $0x560] sm:$0xff]
      %v776 = vld [vmem:[%s359 + $0x568] sm:$0xff]
      %v777 = vld [vmem:[%s359 + $0x570] sm:$0xff]
      %v778 = vld [vmem:[%s359 + $0x578] sm:$0xff]
      %v779 = vld [vmem:[%s359 + $0x580] sm:$0xff]
      %v780 = vld [vmem:[%s359 + $0x588] sm:$0xff]
      %v781 = vld [vmem:[%s359 + $0x590] sm:$0xff]
      %v782 = vld [vmem:[%s359 + $0x598] sm:$0xff]
      %v783 = vld [vmem:[%s359 + $0x5a0] sm:$0xff]
      %v784 = vld [vmem:[%s359 + $0x5a8] sm:$0xff]
      %v785 = vld [vmem:[%s359 + $0x5b0] sm:$0xff]
      %v786 = vld [vmem:[%s359 + $0x5b8] sm:$0xff]
      %v787 = vld [vmem:[%s359 + $0x5c0] sm:$0xff]
      %v788 = vld [vmem:[%s359 + $0x5c8] sm:$0xff]
      %v789 = vld [vmem:[%s359 + $0x5d0] sm:$0xff]
      %v790 = vld [vmem:[%s359 + $0x5d8] sm:$0xff]
      %v791 = vld [vmem:[%s359 + $0x5e0] sm:$0xff]
      %v792 = vld [vmem:[%s359 + $0x5e8] sm:$0xff]
      %v793 = vld [vmem:[%s359 + $0x5f0] sm:$0xff]
      %v794 = vld [vmem:[%s359 + $0x5f8] sm:$0xff]
      %v795 = vld [vmem:[%s359 + $0x600] sm:$0xff]
      %v796 = vld [vmem:[%s359 + $0x608] sm:$0xff]
      %v797 = vld [vmem:[%s359 + $0x610] sm:$0xff]
      %v798 = vld [vmem:[%s359 + $0x618] sm:$0xff]
      %v799 = vld [vmem:[%s359 + $0x620] sm:$0xff]
      %v800 = vld [vmem:[%s359 + $0x628] sm:$0xff]
      %v801 = vld [vmem:[%s359 + $0x630] sm:$0xff]
      %v802 = vld [vmem:[%s359 + $0x638] sm:$0xff]
      %v803 = vld [vmem:[%s359 + $0x640] sm:$0xff]
      %v804 = vld [vmem:[%s359 + $0x648] sm:$0xff]
      %v805 = vld [vmem:[%s359 + $0x650] sm:$0xff]
      %v806 = vld [vmem:[%s359 + $0x658] sm:$0xff]
      %v807 = vld [vmem:[%s359 + $0x660] sm:$0xff]
      %v808 = vld [vmem:[%s359 + $0x668] sm:$0xff]
      %v809 = vld [vmem:[%s359 + $0x670] sm:$0xff]
      %v810 = vld [vmem:[%s359 + $0x678] sm:$0xff]
      %v811 = vld [vmem:[%s359 + $0x680] sm:$0xff]
      %v812 = vld [vmem:[%s359 + $0x688] sm:$0xff]
      %v813 = vld [vmem:[%s359 + $0x690] sm:$0xff]
      %v814 = vld [vmem:[%s359 + $0x698] sm:$0xff]
      %v815 = vld [vmem:[%s359 + $0x6a0] sm:$0xff]
      %v816 = vld [vmem:[%s359 + $0x6a8] sm:$0xff]
      %v817 = vld [vmem:[%s359 + $0x6b0] sm:$0xff]
      %v818 = vld [vmem:[%s359 + $0x6b8] sm:$0xff]
      %v819 = vld [vmem:[%s359 + $0x6c0] sm:$0xff]
      %v820 = vld [vmem:[%s359 + $0x6c8] sm:$0xff]
      %v821 = vld [vmem:[%s359 + $0x6d0] sm:$0xff]
      %v822 = vld [vmem:[%s359 + $0x6d8] sm:$0xff]
      %v823 = vld [vmem:[%s359 + $0x6e0] sm:$0xff]
      %v824 = vld [vmem:[%s359 + $0x6e8] sm:$0xff]
      %v825 = vld [vmem:[%s359 + $0x6f0] sm:$0xff]
      %v826 = vld [vmem:[%s359 + $0x6f8] sm:$0xff]
      %v827 = vld [vmem:[%s359 + $0x700] sm:$0xff]
      %v828 = vld [vmem:[%s359 + $0x708] sm:$0xff]
      %v829 = vld [vmem:[%s359 + $0x710] sm:$0xff]
      %v830 = vld [vmem:[%s359 + $0x718] sm:$0xff]
      %v831 = vld [vmem:[%s359 + $0x720] sm:$0xff]
      %v832 = vld [vmem:[%s359 + $0x728] sm:$0xff]
      %v833 = vld [vmem:[%s359 + $0x730] sm:$0xff]
      %v834 = vld [vmem:[%s359 + $0x738] sm:$0xff]
      %v835 = vld [vmem:[%s359 + $0x740] sm:$0xff]
      %v836 = vld [vmem:[%s359 + $0x748] sm:$0xff]
      %v837 = vld [vmem:[%s359 + $0x750] sm:$0xff]
      %v838 = vld [vmem:[%s359 + $0x758] sm:$0xff]
      %v839 = vld [vmem:[%s359 + $0x760] sm:$0xff]
      %v840 = vld [vmem:[%s359 + $0x768] sm:$0xff]
      %v841 = vld [vmem:[%s359 + $0x770] sm:$0xff]
      %v842 = vld [vmem:[%s359 + $0x778] sm:$0xff]
      %v843 = vld [vmem:[%s359 + $0x780] sm:$0xff]
      %v844 = vld [vmem:[%s359 + $0x788] sm:$0xff]
      %v845 = vld [vmem:[%s359 + $0x790] sm:$0xff]
      %v846 = vld [vmem:[%s359 + $0x798] sm:$0xff]
      %v847 = vld [vmem:[%s359 + $0x7a0] sm:$0xff]
      %v848 = vld [vmem:[%s359 + $0x7a8] sm:$0xff]
      %v849 = vld [vmem:[%s359 + $0x7b0] sm:$0xff]
      %v850 = vld [vmem:[%s359 + $0x7b8] sm:$0xff]
      %v851 = vld [vmem:[%s359 + $0x7c0] sm:$0xff]
      %v852 = vld [vmem:[%s359 + $0x7c8] sm:$0xff]
      %v853 = vld [vmem:[%s359 + $0x7d0] sm:$0xff]
      %v854 = vld [vmem:[%s359 + $0x7d8] sm:$0xff]
      %v855 = vld [vmem:[%s359 + $0x7e0] sm:$0xff]
      %v856 = vld [vmem:[%s359 + $0x7e8] sm:$0xff]
      %v857 = vld [vmem:[%s359 + $0x7f0] sm:$0xff]
      %v858 = vld [vmem:[%s359 + $0x7f8] sm:$0xff]
      %859 = vmatprep.subr.mxu0 0.0
      %860 = vmatpush1.msra.mxu0 %v618
      %861 = vmatprep.subr.mxu0 0.0
      %862 = vmatpush1.msra.mxu0 %v617
      %863 = vmatprep.subr.mxu0 0.0
      %864 = vmatpush1.msra.mxu0 %v616
      %865 = vmatprep.subr.mxu0 0.0
      %866 = vmatpush1.msra.mxu0 %v615
      %867 = vmatprep.subr.mxu0 0.0
      %868 = vmatpush1.msra.mxu0 %v614
      %869 = vmatprep.subr.mxu0 0.0
      %870 = vmatpush1.msra.mxu0 %v613
      %871 = vmatprep.subr.mxu0 0.0
      %872 = vmatpush1.msra.mxu0 %v612
      %873 = vmatprep.subr.mxu0 0.0
      %874 = vmatpush1.msra.mxu0 %v611
      %875 = vmatprep.subr.mxu0 0.0
      %876 = vmatpush1.msra.mxu0 %v610
      %877 = vmatprep.subr.mxu0 0.0
      %878 = vmatpush1.msra.mxu0 %v609
      %879 = vmatprep.subr.mxu0 0.0
      %880 = vmatpush1.msra.mxu0 %v608
      %881 = vmatprep.subr.mxu0 0.0
      %882 = vmatpush1.msra.mxu0 %v607
      %883 = vmatprep.subr.mxu0 0.0
      %884 = vmatpush1.msra.mxu0 %v606
      %885 = vmatprep.subr.mxu0 0.0
      %886 = vmatpush1.msra.mxu0 %v605
      %887 = vmatprep.subr.mxu0 0.0
      %888 = vmatpush1.msra.mxu0 %v604
      %889 = vmatprep.subr.mxu0 0.0
      %890 = vmatpush1.msra.mxu0 %v603
      %891 = vmatprep.subr.mxu0 0.0
      %892 = vmatpush2.msra.mxu0 %v634
      %893 = vmatprep.subr.mxu0 0.0
      %894 = vmatpush2.msra.mxu0 %v633
      %895 = vmatprep.subr.mxu0 0.0
      %896 = vmatpush2.msra.mxu0 %v632
      %897 = vmatprep.subr.mxu0 0.0
      %898 = vmatpush2.msra.mxu0 %v631
      %899 = vmatprep.subr.mxu0 0.0
      %900 = vmatpush2.msra.mxu0 %v630
      %901 = vmatprep.subr.mxu0 0.0
      %902 = vmatpush2.msra.mxu0 %v629
      %903 = vmatprep.subr.mxu0 0.0
      %904 = vmatpush2.msra.mxu0 %v628
      %905 = vmatprep.subr.mxu0 0.0
      %906 = vmatpush2.msra.mxu0 %v627
      %907 = vmatprep.subr.mxu0 0.0
      %908 = vmatpush2.msra.mxu0 %v626
      %909 = vmatprep.subr.mxu0 0.0
      %910 = vmatpush2.msra.mxu0 %v625
      %911 = vmatprep.subr.mxu0 0.0
      %912 = vmatpush2.msra.mxu0 %v624
      %913 = vmatprep.subr.mxu0 0.0
      %914 = vmatpush2.msra.mxu0 %v623
      %915 = vmatprep.subr.mxu0 0.0
      %916 = vmatpush2.msra.mxu0 %v622
      %917 = vmatprep.subr.mxu0 0.0
      %918 = vmatpush2.msra.mxu0 %v621
      %919 = vmatprep.subr.mxu0 0.0
      %920 = vmatpush2.msra.mxu0 %v620
      %921 = vmatprep.subr.mxu0 0.0
      %922 = vmatpush2.msra.mxu0 %v619
      %923 = vmatprep.mubr.f32.mxu0 %v587
      %924 = vmatmul.mubr.f32.gmra.mxu0 %v586
      %v925 = vpop.f32.mrf.mxu0
      %v926 = vadd.f32 0.0, %v925
      %v927 = vpop.f32.mrf.mxu0
      %928 = vdwg.mxu0
      %929 = vmatprep.subr.mxu0 0.0
      %930 = vmatpush1.msra.mxu0 %v650
      %931 = vmatprep.subr.mxu0 0.0
      %932 = vmatpush1.msra.mxu0 %v649
      %933 = vmatprep.subr.mxu0 0.0
      %934 = vmatpush1.msra.mxu0 %v648
      %935 = vmatprep.subr.mxu0 0.0
      %936 = vmatpush1.msra.mxu0 %v647
      %937 = vmatprep.subr.mxu0 0.0
      %938 = vmatpush1.msra.mxu0 %v646
      %939 = vmatprep.subr.mxu0 0.0
      %940 = vmatpush1.msra.mxu0 %v645
      %941 = vmatprep.subr.mxu0 0.0
      %942 = vmatpush1.msra.mxu0 %v644
      %943 = vmatprep.subr.mxu0 0.0
      %944 = vmatpush1.msra.mxu0 %v643
      %945 = vmatprep.subr.mxu0 0.0
      %946 = vmatpush1.msra.mxu0 %v642
      %947 = vmatprep.subr.mxu0 0.0
      %948 = vmatpush1.msra.mxu0 %v641
      %949 = vmatprep.subr.mxu0 0.0
      %950 = vmatpush1.msra.mxu0 %v640
      %951 = vmatprep.subr.mxu0 0.0
      %952 = vmatpush1.msra.mxu0 %v639
      %953 = vmatprep.subr.mxu0 0.0
      %954 = vmatpush1.msra.mxu0 %v638
      %955 = vmatprep.subr.mxu0 0.0
      %956 = vmatpush1.msra.mxu0 %v637
      %957 = vmatprep.subr.mxu0 0.0
      %958 = vmatpush1.msra.mxu0 %v636
      %959 = vmatprep.subr.mxu0 0.0
      %960 = vmatpush1.msra.mxu0 %v635
      %961 = vmatprep.subr.mxu0 0.0
      %962 = vmatpush2.msra.mxu0 %v666
      %963 = vmatprep.subr.mxu0 0.0
      %964 = vmatpush2.msra.mxu0 %v665
      %965 = vmatprep.subr.mxu0 0.0
      %966 = vmatpush2.msra.mxu0 %v664
      %967 = vmatprep.subr.mxu0 0.0
      %968 = vmatpush2.msra.mxu0 %v663
      %969 = vmatprep.subr.mxu0 0.0
      %970 = vmatpush2.msra.mxu0 %v662
      %971 = vmatprep.subr.mxu0 0.0
      %972 = vmatpush2.msra.mxu0 %v661
      %973 = vmatprep.subr.mxu0 0.0
      %974 = vmatpush2.msra.mxu0 %v660
      %975 = vmatprep.subr.mxu0 0.0
      %976 = vmatpush2.msra.mxu0 %v659
      %977 = vmatprep.subr.mxu0 0.0
      %978 = vmatpush2.msra.mxu0 %v658
      %979 = vmatprep.subr.mxu0 0.0
      %980 = vmatpush2.msra.mxu0 %v657
      %981 = vmatprep.subr.mxu0 0.0
      %982 = vmatpush2.msra.mxu0 %v656
      %983 = vmatprep.subr.mxu0 0.0
      %984 = vmatpush2.msra.mxu0 %v655
      %985 = vmatprep.subr.mxu0 0.0
      %986 = vmatpush2.msra.mxu0 %v654
      %987 = vmatprep.subr.mxu0 0.0
      %988 = vmatpush2.msra.mxu0 %v653
      %989 = vmatprep.subr.mxu0 0.0
      %990 = vmatpush2.msra.mxu0 %v652
      %991 = vmatprep.subr.mxu0 0.0
      %992 = vmatpush2.msra.mxu0 %v651
      %993 = vmatprep.mubr.f32.mxu0 %v589
      %994 = vmatmul.mubr.f32.gmra.mxu0 %v588
      %v995 = vpop.f32.mrf.mxu0
      %v996 = vadd.f32 %v926, %v995
      %v997 = vpop.f32.mrf.mxu0
      %998 = vdwg.mxu0
      %999 = vmatprep.subr.mxu0 0.0
      %1000 = vmatpush1.msra.mxu0 %v682
      %1001 = vmatprep.subr.mxu0 0.0
      %1002 = vmatpush1.msra.mxu0 %v681
      %1003 = vmatprep.subr.mxu0 0.0
      %1004 = vmatpush1.msra.mxu0 %v680
      %1005 = vmatprep.subr.mxu0 0.0
      %1006 = vmatpush1.msra.mxu0 %v679
      %1007 = vmatprep.subr.mxu0 0.0
      %1008 = vmatpush1.msra.mxu0 %v678
      %1009 = vmatprep.subr.mxu0 0.0
      %1010 = vmatpush1.msra.mxu0 %v677
      %1011 = vmatprep.subr.mxu0 0.0
      %1012 = vmatpush1.msra.mxu0 %v676
      %1013 = vmatprep.subr.mxu0 0.0
      %1014 = vmatpush1.msra.mxu0 %v675
      %1015 = vmatprep.subr.mxu0 0.0
      %1016 = vmatpush1.msra.mxu0 %v674
      %1017 = vmatprep.subr.mxu0 0.0
      %1018 = vmatpush1.msra.mxu0 %v673
      %1019 = vmatprep.subr.mxu0 0.0
      %1020 = vmatpush1.msra.mxu0 %v672
      %1021 = vmatprep.subr.mxu0 0.0
      %1022 = vmatpush1.msra.mxu0 %v671
      %1023 = vmatprep.subr.mxu0 0.0
      %1024 = vmatpush1.msra.mxu0 %v670
      %1025 = vmatprep.subr.mxu0 0.0
      %1026 = vmatpush1.msra.mxu0 %v669
      %1027 = vmatprep.subr.mxu0 0.0
      %1028 = vmatpush1.msra.mxu0 %v668
      %1029 = vmatprep.subr.mxu0 0.0
      %1030 = vmatpush1.msra.mxu0 %v667
      %1031 = vmatprep.subr.mxu0 0.0
      %1032 = vmatpush2.msra.mxu0 %v698
      %1033 = vmatprep.subr.mxu0 0.0
      %1034 = vmatpush2.msra.mxu0 %v697
      %1035 = vmatprep.subr.mxu0 0.0
      %1036 = vmatpush2.msra.mxu0 %v696
      %1037 = vmatprep.subr.mxu0 0.0
      %1038 = vmatpush2.msra.mxu0 %v695
      %1039 = vmatprep.subr.mxu0 0.0
      %1040 = vmatpush2.msra.mxu0 %v694
      %1041 = vmatprep.subr.mxu0 0.0
      %1042 = vmatpush2.msra.mxu0 %v693
      %1043 = vmatprep.subr.mxu0 0.0
      %1044 = vmatpush2.msra.mxu0 %v692
      %1045 = vmatprep.subr.mxu0 0.0
      %1046 = vmatpush2.msra.mxu0 %v691
      %1047 = vmatprep.subr.mxu0 0.0
      %1048 = vmatpush2.msra.mxu0 %v690
      %1049 = vmatprep.subr.mxu0 0.0
      %1050 = vmatpush2.msra.mxu0 %v689
      %1051 = vmatprep.subr.mxu0 0.0
      %1052 = vmatpush2.msra.mxu0 %v688
      %1053 = vmatprep.subr.mxu0 0.0
      %1054 = vmatpush2.msra.mxu0 %v687
      %1055 = vmatprep.subr.mxu0 0.0
      %1056 = vmatpush2.msra.mxu0 %v686
      %1057 = vmatprep.subr.mxu0 0.0
      %1058 = vmatpush2.msra.mxu0 %v685
      %1059 = vmatprep.subr.mxu0 0.0
      %1060 = vmatpush2.msra.mxu0 %v684
      %1061 = vmatprep.subr.mxu0 0.0
      %1062 = vmatpush2.msra.mxu0 %v683
      %1063 = vmatprep.mubr.f32.mxu0 %v591
      %1064 = vmatmul.mubr.f32.gmra.mxu0 %v590
      %v1065 = vpop.f32.mrf.mxu0
      %v1066 = vadd.f32 %v996, %v1065
      %v1067 = vpop.f32.mrf.mxu0
      %1068 = vdwg.mxu0
      %1069 = vmatprep.subr.mxu0 0.0
      %1070 = vmatpush1.msra.mxu0 %v714
      %1071 = vmatprep.subr.mxu0 0.0
      %1072 = vmatpush1.msra.mxu0 %v713
      %1073 = vmatprep.subr.mxu0 0.0
      %1074 = vmatpush1.msra.mxu0 %v712
      %1075 = vmatprep.subr.mxu0 0.0
      %1076 = vmatpush1.msra.mxu0 %v711
      %1077 = vmatprep.subr.mxu0 0.0
      %1078 = vmatpush1.msra.mxu0 %v710
      %1079 = vmatprep.subr.mxu0 0.0
      %1080 = vmatpush1.msra.mxu0 %v709
      %1081 = vmatprep.subr.mxu0 0.0
      %1082 = vmatpush1.msra.mxu0 %v708
      %1083 = vmatprep.subr.mxu0 0.0
      %1084 = vmatpush1.msra.mxu0 %v707
      %1085 = vmatprep.subr.mxu0 0.0
      %1086 = vmatpush1.msra.mxu0 %v706
      %1087 = vmatprep.subr.mxu0 0.0
      %1088 = vmatpush1.msra.mxu0 %v705
      %1089 = vmatprep.subr.mxu0 0.0
      %1090 = vmatpush1.msra.mxu0 %v704
      %1091 = vmatprep.subr.mxu0 0.0
      %1092 = vmatpush1.msra.mxu0 %v703
      %1093 = vmatprep.subr.mxu0 0.0
      %1094 = vmatpush1.msra.mxu0 %v702
      %1095 = vmatprep.subr.mxu0 0.0
      %1096 = vmatpush1.msra.mxu0 %v701
      %1097 = vmatprep.subr.mxu0 0.0
      %1098 = vmatpush1.msra.mxu0 %v700
      %1099 = vmatprep.subr.mxu0 0.0
      %1100 = vmatpush1.msra.mxu0 %v699
      %1101 = vmatprep.subr.mxu0 0.0
      %1102 = vmatpush2.msra.mxu0 %v730
      %1103 = vmatprep.subr.mxu0 0.0
      %1104 = vmatpush2.msra.mxu0 %v729
      %1105 = vmatprep.subr.mxu0 0.0
      %1106 = vmatpush2.msra.mxu0 %v728
      %1107 = vmatprep.subr.mxu0 0.0
      %1108 = vmatpush2.msra.mxu0 %v727
      %1109 = vmatprep.subr.mxu0 0.0
      %1110 = vmatpush2.msra.mxu0 %v726
      %1111 = vmatprep.subr.mxu0 0.0
      %1112 = vmatpush2.msra.mxu0 %v725
      %1113 = vmatprep.subr.mxu0 0.0
      %1114 = vmatpush2.msra.mxu0 %v724
      %1115 = vmatprep.subr.mxu0 0.0
      %1116 = vmatpush2.msra.mxu0 %v723
      %1117 = vmatprep.subr.mxu0 0.0
      %1118 = vmatpush2.msra.mxu0 %v722
      %1119 = vmatprep.subr.mxu0 0.0
      %1120 = vmatpush2.msra.mxu0 %v721
      %1121 = vmatprep.subr.mxu0 0.0
      %1122 = vmatpush2.msra.mxu0 %v720
      %1123 = vmatprep.subr.mxu0 0.0
      %1124 = vmatpush2.msra.mxu0 %v719
      %1125 = vmatprep.subr.mxu0 0.0
      %1126 = vmatpush2.msra.mxu0 %v718
      %1127 = vmatprep.subr.mxu0 0.0
      %1128 = vmatpush2.msra.mxu0 %v717
      %1129 = vmatprep.subr.mxu0 0.0
      %1130 = vmatpush2.msra.mxu0 %v716
      %1131 = vmatprep.subr.mxu0 0.0
      %1132 = vmatpush2.msra.mxu0 %v715
      %1133 = vmatprep.mubr.f32.mxu0 %v593
      %1134 = vmatmul.mubr.f32.gmra.mxu0 %v592
      %v1135 = vpop.f32.mrf.mxu0
      %v1136 = vadd.f32 %v1066, %v1135
      %v1137 = vpop.f32.mrf.mxu0
      %1138 = vdwg.mxu0
      %1139 = vmatprep.subr.mxu0 0.0
      %1140 = vmatpush1.msra.mxu0 %v746
      %1141 = vmatprep.subr.mxu0 0.0
      %1142 = vmatpush1.msra.mxu0 %v745
      %1143 = vmatprep.subr.mxu0 0.0
      %1144 = vmatpush1.msra.mxu0 %v744
      %1145 = vmatprep.subr.mxu0 0.0
      %1146 = vmatpush1.msra.mxu0 %v743
      %1147 = vmatprep.subr.mxu0 0.0
      %1148 = vmatpush1.msra.mxu0 %v742
      %1149 = vmatprep.subr.mxu0 0.0
      %1150 = vmatpush1.msra.mxu0 %v741
      %1151 = vmatprep.subr.mxu0 0.0
      %1152 = vmatpush1.msra.mxu0 %v740
      %1153 = vmatprep.subr.mxu0 0.0
      %1154 = vmatpush1.msra.mxu0 %v739
      %1155 = vmatprep.subr.mxu0 0.0
      %1156 = vmatpush1.msra.mxu0 %v738
      %1157 = vmatprep.subr.mxu0 0.0
      %1158 = vmatpush1.msra.mxu0 %v737
      %1159 = vmatprep.subr.mxu0 0.0
      %1160 = vmatpush1.msra.mxu0 %v736
      %1161 = vmatprep.subr.mxu0 0.0
      %1162 = vmatpush1.msra.mxu0 %v735
      %1163 = vmatprep.subr.mxu0 0.0
      %1164 = vmatpush1.msra.mxu0 %v734
      %1165 = vmatprep.subr.mxu0 0.0
      %1166 = vmatpush1.msra.mxu0 %v733
      %1167 = vmatprep.subr.mxu0 0.0
      %1168 = vmatpush1.msra.mxu0 %v732
      %1169 = vmatprep.subr.mxu0 0.0
      %1170 = vmatpush1.msra.mxu0 %v731
      %1171 = vmatprep.subr.mxu0 0.0
      %1172 = vmatpush2.msra.mxu0 %v762
      %1173 = vmatprep.subr.mxu0 0.0
      %1174 = vmatpush2.msra.mxu0 %v761
      %1175 = vmatprep.subr.mxu0 0.0
      %1176 = vmatpush2.msra.mxu0 %v760
      %1177 = vmatprep.subr.mxu0 0.0
      %1178 = vmatpush2.msra.mxu0 %v759
      %1179 = vmatprep.subr.mxu0 0.0
      %1180 = vmatpush2.msra.mxu0 %v758
      %1181 = vmatprep.subr.mxu0 0.0
      %1182 = vmatpush2.msra.mxu0 %v757
      %1183 = vmatprep.subr.mxu0 0.0
      %1184 = vmatpush2.msra.mxu0 %v756
      %1185 = vmatprep.subr.mxu0 0.0
      %1186 = vmatpush2.msra.mxu0 %v755
      %1187 = vmatprep.subr.mxu0 0.0
      %1188 = vmatpush2.msra.mxu0 %v754
      %1189 = vmatprep.subr.mxu0 0.0
      %1190 = vmatpush2.msra.mxu0 %v753
      %1191 = vmatprep.subr.mxu0 0.0
      %1192 = vmatpush2.msra.mxu0 %v752
      %1193 = vmatprep.subr.mxu0 0.0
      %1194 = vmatpush2.msra.mxu0 %v751
      %1195 = vmatprep.subr.mxu0 0.0
      %1196 = vmatpush2.msra.mxu0 %v750
      %1197 = vmatprep.subr.mxu0 0.0
      %1198 = vmatpush2.msra.mxu0 %v749
      %1199 = vmatprep.subr.mxu0 0.0
      %1200 = vmatpush2.msra.mxu0 %v748
      %1201 = vmatprep.subr.mxu0 0.0
      %1202 = vmatpush2.msra.mxu0 %v747
      %1203 = vmatprep.mubr.f32.mxu0 %v595
      %1204 = vmatmul.mubr.f32.gmra.mxu0 %v594
      %v1205 = vpop.f32.mrf.mxu0
      %v1206 = vadd.f32 %v1136, %v1205
      %v1207 = vpop.f32.mrf.mxu0
      %1208 = vdwg.mxu0
      %1209 = vmatprep.subr.mxu0 0.0
      %1210 = vmatpush1.msra.mxu0 %v778
      %1211 = vmatprep.subr.mxu0 0.0
      %1212 = vmatpush1.msra.mxu0 %v777
      %1213 = vmatprep.subr.mxu0 0.0
      %1214 = vmatpush1.msra.mxu0 %v776
      %1215 = vmatprep.subr.mxu0 0.0
      %1216 = vmatpush1.msra.mxu0 %v775
      %1217 = vmatprep.subr.mxu0 0.0
      %1218 = vmatpush1.msra.mxu0 %v774
      %1219 = vmatprep.subr.mxu0 0.0
      %1220 = vmatpush1.msra.mxu0 %v773
      %1221 = vmatprep.subr.mxu0 0.0
      %1222 = vmatpush1.msra.mxu0 %v772
      %1223 = vmatprep.subr.mxu0 0.0
      %1224 = vmatpush1.msra.mxu0 %v771
      %1225 = vmatprep.subr.mxu0 0.0
      %1226 = vmatpush1.msra.mxu0 %v770
      %1227 = vmatprep.subr.mxu0 0.0
      %1228 = vmatpush1.msra.mxu0 %v769
      %1229 = vmatprep.subr.mxu0 0.0
      %1230 = vmatpush1.msra.mxu0 %v768
      %1231 = vmatprep.subr.mxu0 0.0
      %1232 = vmatpush1.msra.mxu0 %v767
      %1233 = vmatprep.subr.mxu0 0.0
      %1234 = vmatpush1.msra.mxu0 %v766
      %1235 = vmatprep.subr.mxu0 0.0
      %1236 = vmatpush1.msra.mxu0 %v765
      %1237 = vmatprep.subr.mxu0 0.0
      %1238 = vmatpush1.msra.mxu0 %v764
      %1239 = vmatprep.subr.mxu0 0.0
      %1240 = vmatpush1.msra.mxu0 %v763
      %1241 = vmatprep.subr.mxu0 0.0
      %1242 = vmatpush2.msra.mxu0 %v794
      %1243 = vmatprep.subr.mxu0 0.0
      %1244 = vmatpush2.msra.mxu0 %v793
      %1245 = vmatprep.subr.mxu0 0.0
      %1246 = vmatpush2.msra.mxu0 %v792
      %1247 = vmatprep.subr.mxu0 0.0
      %1248 = vmatpush2.msra.mxu0 %v791
      %1249 = vmatprep.subr.mxu0 0.0
      %1250 = vmatpush2.msra.mxu0 %v790
      %1251 = vmatprep.subr.mxu0 0.0
      %1252 = vmatpush2.msra.mxu0 %v789
      %1253 = vmatprep.subr.mxu0 0.0
      %1254 = vmatpush2.msra.mxu0 %v788
      %1255 = vmatprep.subr.mxu0 0.0
      %1256 = vmatpush2.msra.mxu0 %v787
      %1257 = vmatprep.subr.mxu0 0.0
      %1258 = vmatpush2.msra.mxu0 %v786
      %1259 = vmatprep.subr.mxu0 0.0
      %1260 = vmatpush2.msra.mxu0 %v785
      %1261 = vmatprep.subr.mxu0 0.0
      %1262 = vmatpush2.msra.mxu0 %v784
      %1263 = vmatprep.subr.mxu0 0.0
      %1264 = vmatpush2.msra.mxu0 %v783
      %1265 = vmatprep.subr.mxu0 0.0
      %1266 = vmatpush2.msra.mxu0 %v782
      %1267 = vmatprep.subr.mxu0 0.0
      %1268 = vmatpush2.msra.mxu0 %v781
      %1269 = vmatprep.subr.mxu0 0.0
      %1270 = vmatpush2.msra.mxu0 %v780
      %1271 = vmatprep.subr.mxu0 0.0
      %1272 = vmatpush2.msra.mxu0 %v779
      %1273 = vmatprep.mubr.f32.mxu0 %v597
      %1274 = vmatmul.mubr.f32.gmra.mxu0 %v596
      %v1275 = vpop.f32.mrf.mxu0
      %v1276 = vadd.f32 %v1206, %v1275
      %v1277 = vpop.f32.mrf.mxu0
      %1278 = vdwg.mxu0
      %1279 = vmatprep.subr.mxu0 0.0
      %1280 = vmatpush1.msra.mxu0 %v810
      %1281 = vmatprep.subr.mxu0 0.0
      %1282 = vmatpush1.msra.mxu0 %v809
      %1283 = vmatprep.subr.mxu0 0.0
      %1284 = vmatpush1.msra.mxu0 %v808
      %1285 = vmatprep.subr.mxu0 0.0
      %1286 = vmatpush1.msra.mxu0 %v807
      %1287 = vmatprep.subr.mxu0 0.0
      %1288 = vmatpush1.msra.mxu0 %v806
      %1289 = vmatprep.subr.mxu0 0.0
      %1290 = vmatpush1.msra.mxu0 %v805
      %1291 = vmatprep.subr.mxu0 0.0
      %1292 = vmatpush1.msra.mxu0 %v804
      %1293 = vmatprep.subr.mxu0 0.0
      %1294 = vmatpush1.msra.mxu0 %v803
      %1295 = vmatprep.subr.mxu0 0.0
      %1296 = vmatpush1.msra.mxu0 %v802
      %1297 = vmatprep.subr.mxu0 0.0
      %1298 = vmatpush1.msra.mxu0 %v801
      %1299 = vmatprep.subr.mxu0 0.0
      %1300 = vmatpush1.msra.mxu0 %v800
      %1301 = vmatprep.subr.mxu0 0.0
      %1302 = vmatpush1.msra.mxu0 %v799
      %1303 = vmatprep.subr.mxu0 0.0
      %1304 = vmatpush1.msra.mxu0 %v798
      %1305 = vmatprep.subr.mxu0 0.0
      %1306 = vmatpush1.msra.mxu0 %v797
      %1307 = vmatprep.subr.mxu0 0.0
      %1308 = vmatpush1.msra.mxu0 %v796
      %1309 = vmatprep.subr.mxu0 0.0
      %1310 = vmatpush1.msra.mxu0 %v795
      %1311 = vmatprep.subr.mxu0 0.0
      %1312 = vmatpush2.msra.mxu0 %v826
      %1313 = vmatprep.subr.mxu0 0.0
      %1314 = vmatpush2.msra.mxu0 %v825
      %1315 = vmatprep.subr.mxu0 0.0
      %1316 = vmatpush2.msra.mxu0 %v824
      %1317 = vmatprep.subr.mxu0 0.0
      %1318 = vmatpush2.msra.mxu0 %v823
      %1319 = vmatprep.subr.mxu0 0.0
      %1320 = vmatpush2.msra.mxu0 %v822
      %1321 = vmatprep.subr.mxu0 0.0
      %1322 = vmatpush2.msra.mxu0 %v821
      %1323 = vmatprep.subr.mxu0 0.0
      %1324 = vmatpush2.msra.mxu0 %v820
      %1325 = vmatprep.subr.mxu0 0.0
      %1326 = vmatpush2.msra.mxu0 %v819
      %1327 = vmatprep.subr.mxu0 0.0
      %1328 = vmatpush2.msra.mxu0 %v818
      %1329 = vmatprep.subr.mxu0 0.0
      %1330 = vmatpush2.msra.mxu0 %v817
      %1331 = vmatprep.subr.mxu0 0.0
      %1332 = vmatpush2.msra.mxu0 %v816
      %1333 = vmatprep.subr.mxu0 0.0
      %1334 = vmatpush2.msra.mxu0 %v815
      %1335 = vmatprep.subr.mxu0 0.0
      %1336 = vmatpush2.msra.mxu0 %v814
      %1337 = vmatprep.subr.mxu0 0.0
      %1338 = vmatpush2.msra.mxu0 %v813
      %1339 = vmatprep.subr.mxu0 0.0
      %1340 = vmatpush2.msra.mxu0 %v812
      %1341 = vmatprep.subr.mxu0 0.0
      %1342 = vmatpush2.msra.mxu0 %v811
      %1343 = vmatprep.mubr.f32.mxu0 %v599
      %1344 = vmatmul.mubr.f32.gmra.mxu0 %v598
      %v1345 = vpop.f32.mrf.mxu0
      %v1346 = vadd.f32 %v1276, %v1345
      %v1347 = vpop.f32.mrf.mxu0
      %1348 = vdwg.mxu0
      %1349 = vmatprep.subr.mxu0 0.0
      %1350 = vmatpush1.msra.mxu0 %v842
      %1351 = vmatprep.subr.mxu0 0.0
      %1352 = vmatpush1.msra.mxu0 %v841
      %1353 = vmatprep.subr.mxu0 0.0
      %1354 = vmatpush1.msra.mxu0 %v840
      %1355 = vmatprep.subr.mxu0 0.0
      %1356 = vmatpush1.msra.mxu0 %v839
      %1357 = vmatprep.subr.mxu0 0.0
      %1358 = vmatpush1.msra.mxu0 %v838
      %1359 = vmatprep.subr.mxu0 0.0
      %1360 = vmatpush1.msra.mxu0 %v837
      %1361 = vmatprep.subr.mxu0 0.0
      %1362 = vmatpush1.msra.mxu0 %v836
      %1363 = vmatprep.subr.mxu0 0.0
      %1364 = vmatpush1.msra.mxu0 %v835
      %1365 = vmatprep.subr.mxu0 0.0
      %1366 = vmatpush1.msra.mxu0 %v834
      %1367 = vmatprep.subr.mxu0 0.0
      %1368 = vmatpush1.msra.mxu0 %v833
      %1369 = vmatprep.subr.mxu0 0.0
      %1370 = vmatpush1.msra.mxu0 %v832
      %1371 = vmatprep.subr.mxu0 0.0
      %1372 = vmatpush1.msra.mxu0 %v831
      %1373 = vmatprep.subr.mxu0 0.0
      %1374 = vmatpush1.msra.mxu0 %v830
      %1375 = vmatprep.subr.mxu0 0.0
      %1376 = vmatpush1.msra.mxu0 %v829
      %1377 = vmatprep.subr.mxu0 0.0
      %1378 = vmatpush1.msra.mxu0 %v828
      %1379 = vmatprep.subr.mxu0 0.0
      %1380 = vmatpush1.msra.mxu0 %v827
      %1381 = vmatprep.subr.mxu0 0.0
      %1382 = vmatpush2.msra.mxu0 %v858
      %1383 = vmatprep.subr.mxu0 0.0
      %1384 = vmatpush2.msra.mxu0 %v857
      %1385 = vmatprep.subr.mxu0 0.0
      %1386 = vmatpush2.msra.mxu0 %v856
      %1387 = vmatprep.subr.mxu0 0.0
      %1388 = vmatpush2.msra.mxu0 %v855
      %1389 = vmatprep.subr.mxu0 0.0
      %1390 = vmatpush2.msra.mxu0 %v854
      %1391 = vmatprep.subr.mxu0 0.0
      %1392 = vmatpush2.msra.mxu0 %v853
      %1393 = vmatprep.subr.mxu0 0.0
      %1394 = vmatpush2.msra.mxu0 %v852
      %1395 = vmatprep.subr.mxu0 0.0
      %1396 = vmatpush2.msra.mxu0 %v851
      %1397 = vmatprep.subr.mxu0 0.0
      %1398 = vmatpush2.msra.mxu0 %v850
      %1399 = vmatprep.subr.mxu0 0.0
      %1400 = vmatpush2.msra.mxu0 %v849
      %1401 = vmatprep.subr.mxu0 0.0
      %1402 = vmatpush2.msra.mxu0 %v848
      %1403 = vmatprep.subr.mxu0 0.0
      %1404 = vmatpush2.msra.mxu0 %v847
      %1405 = vmatprep.subr.mxu0 0.0
      %1406 = vmatpush2.msra.mxu0 %v846
      %1407 = vmatprep.subr.mxu0 0.0
      %1408 = vmatpush2.msra.mxu0 %v845
      %1409 = vmatprep.subr.mxu0 0.0
      %1410 = vmatpush2.msra.mxu0 %v844
      %1411 = vmatprep.subr.mxu0 0.0
      %1412 = vmatpush2.msra.mxu0 %v843
      %1413 = vmatprep.mubr.f32.mxu0 %v601
      %1414 = vmatmul.mubr.f32.gmra.mxu0 %v600
      %v1415 = vpop.f32.mrf.mxu0
      %v1416 = vadd.f32 %v1346, %v1415
      %v1417 = vpop.f32.mrf.mxu0
      %1418 = vdwg.mxu0
      %v1419 = vadd.f32 %v602, %v1416
      %1420 = vst [vmem:[#allocation2] sm:$0xff] %v1419
      %p1421 = scmp.eq.s32.totalorder %s23, 1
      // Predicated region
      $region53: #{encoder_forward.3} parent=47 // pred_check
        %p1422 = pneg %p1421
      $region54: #{encoder_forward.3} parent=47 // pred_check_branch
        %1424 = sbr.rel (%p1422) target = $region56
      $region55: #{encoder_forward.3} parent=47 // pred_region
        %v1425 = vld [vmem:[#allocation2] sm:$0xff]
        %v1426 = vld [vmem:[%s4] sm:$0x1]
        %v1428 = vlaneseq
        %v1429 = vshrl.u32 %v1428, 7
        %v1430 = vsub.s32 0, %v1429
        %v1431 = vrot.slane %v1426, %v1430
        %v1433 = vadd.f32 %v1425, %v1431
        %v1434 = vmax.f32 %v1433, 0.0
        %vm1435 = vcmp.ne.f32.partialorder %v1433, %v1433
        %v1436 = vadd.f32 %v1433, 0.0
        %v1437 = vand.u32 2147483647, %v1433
        %v1438 = vsub.f32 0.0, %v1437
        %v1439 = vmul.f32 %v1438, 1.442695
        %v1440 = vpow.pop %v1439
        %v1441 = vadd.f32 %v1440, 1.0
        %v1442 = vlog2.pop %v1441
        %v1443 = vmul.f32 %v1442, 0.6931472
        %v1444 = vmul.f32 -0.5, %v1440
        %v1445 = vadd.f32 %v1444, 1.0
        %v1446 = vmul.f32 %v1445, %v1440
        %v1447 = vand.u32 2147483647, %v1440
        %vm1448 = vcmp.lt.f32.partialorder %v1447, 0.0004427343
        %v1449 = vsel %vm1448, %v1446, %v1443
        %v1450 = vadd.f32 %v1434, %v1449
        %v1451 = vsel %vm1435, %v1436, %v1450
        %v1452 = vld [vmem:[%s5] sm:$0xff]
        %v1453 = vld [vmem:[%s5 + $0x8] sm:$0xff]
        %v1454 = vld [vmem:[%s5 + $0x10] sm:$0xff]
        %v1455 = vld [vmem:[%s5 + $0x18] sm:$0xff]
        %v1456 = vld [vmem:[%s5 + $0x20] sm:$0xff]
        %v1457 = vld [vmem:[%s5 + $0x28] sm:$0xff]
        %v1458 = vld [vmem:[%s5 + $0x30] sm:$0xff]
        %v1459 = vld [vmem:[%s5 + $0x38] sm:$0xff]
        %v1460 = vld [vmem:[%s5 + $0x40] sm:$0xff]
        %v1461 = vld [vmem:[%s5 + $0x48] sm:$0xff]
        %v1462 = vld [vmem:[%s5 + $0x50] sm:$0xff]
        %v1463 = vld [vmem:[%s5 + $0x58] sm:$0xff]
        %v1464 = vld [vmem:[%s5 + $0x60] sm:$0xff]
        %v1465 = vld [vmem:[%s5 + $0x68] sm:$0xff]
        %v1466 = vld [vmem:[%s5 + $0x70] sm:$0xff]
        %v1467 = vld [vmem:[%s5 + $0x78] sm:$0xff]
        %v1468 = vld [vmem:[%s6] sm:$0x1]
        %v1470 = vlaneseq
        %v1471 = vshrl.u32 %v1470, 7
        %v1472 = vsub.s32 0, %v1471
        %v1473 = vrot.slane %v1468, %v1472
        %1475 = vmatprep.subr.mxu0 0.0
        %1476 = vmatpush1.msra.mxu0 %v1467
        %1477 = vmatprep.subr.mxu0 0.0
        %1478 = vmatpush1.msra.mxu0 %v1466
        %1479 = vmatprep.subr.mxu0 0.0
        %1480 = vmatpush1.msra.mxu0 %v1465
        %1481 = vmatprep.subr.mxu0 0.0
        %1482 = vmatpush1.msra.mxu0 %v1464
        %1483 = vmatprep.subr.mxu0 0.0
        %1484 = vmatpush1.msra.mxu0 %v1463
        %1485 = vmatprep.subr.mxu0 0.0
        %1486 = vmatpush1.msra.mxu0 %v1462
        %1487 = vmatprep.subr.mxu0 0.0
        %1488 = vmatpush1.msra.mxu0 %v1461
        %1489 = vmatprep.subr.mxu0 0.0
        %1490 = vmatpush1.msra.mxu0 %v1460
        %1491 = vmatprep.subr.mxu0 0.0
        %1492 = vmatpush1.msra.mxu0 %v1459
        %1493 = vmatprep.subr.mxu0 0.0
        %1494 = vmatpush1.msra.mxu0 %v1458
        %1495 = vmatprep.subr.mxu0 0.0
        %1496 = vmatpush1.msra.mxu0 %v1457
        %1497 = vmatprep.subr.mxu0 0.0
        %1498 = vmatpush1.msra.mxu0 %v1456
        %1499 = vmatprep.subr.mxu0 0.0
        %1500 = vmatpush1.msra.mxu0 %v1455
        %1501 = vmatprep.subr.mxu0 0.0
        %1502 = vmatpush1.msra.mxu0 %v1454
        %1503 = vmatprep.subr.mxu0 0.0
        %1504 = vmatpush1.msra.mxu0 %v1453
        %1505 = vmatprep.subr.mxu0 0.0
        %1506 = vmatpush1.msra.mxu0 %v1452
        %1507 = vmatprep.subr.mxu0 0.0
        %1508 = vmatpush2.msra.mxu0 0.0
        %1509 = vmatprep.subr.mxu0 0.0
        %1510 = vmatpush2.msra.mxu0 0.0
        %1511 = vmatprep.subr.mxu0 0.0
        %1512 = vmatpush2.msra.mxu0 0.0
        %1513 = vmatprep.subr.mxu0 0.0
        %1514 = vmatpush2.msra.mxu0 0.0
        %1515 = vmatprep.subr.mxu0 0.0
        %1516 = vmatpush2.msra.mxu0 0.0
        %1517 = vmatprep.subr.mxu0 0.0
        %1518 = vmatpush2.msra.mxu0 0.0
        %1519 = vmatprep.subr.mxu0 0.0
        %1520 = vmatpush2.msra.mxu0 0.0
        %1521 = vmatprep.subr.mxu0 0.0
        %1522 = vmatpush2.msra.mxu0 0.0
        %1523 = vmatprep.subr.mxu0 0.0
        %1524 = vmatpush2.msra.mxu0 0.0
        %1525 = vmatprep.subr.mxu0 0.0
        %1526 = vmatpush2.msra.mxu0 0.0
        %1527 = vmatprep.subr.mxu0 0.0
        %1528 = vmatpush2.msra.mxu0 0.0
        %1529 = vmatprep.subr.mxu0 0.0
        %1530 = vmatpush2.msra.mxu0 0.0
        %1531 = vmatprep.subr.mxu0 0.0
        %1532 = vmatpush2.msra.mxu0 0.0
        %1533 = vmatprep.subr.mxu0 0.0
        %1534 = vmatpush2.msra.mxu0 0.0
        %1535 = vmatprep.subr.mxu0 0.0
        %1536 = vmatpush2.msra.mxu0 0.0
        %1537 = vmatprep.subr.mxu0 0.0
        %1538 = vmatpush2.msra.mxu0 0.0
        %1539 = vmatprep.mubr.f32.mxu0 0.0
        %1540 = vmatmul.mubr.f32.gmra.mxu0 %v1451
        %v1541 = vpop.f32.mrf.mxu0
        %v1542 = vadd.f32 %v1473, %v1541
        %v1543 = vpop.f32.mrf.mxu0
        %1544 = vdwg.mxu0
        %v1545 = vlaneseq
        %v1546 = vand.u32 %v1545, 127
        %vm1547 = vcmp.lt.s32.totalorder %v1546, 16
        %v1548 = vsel %vm1547, 0.0, %v1542
        %v1549 = vmul.f32 %v1548, 1.442695
        %v1550 = vpow.pop %v1549
        %v1551 = vsel %vm1547, %v1542, %v1550
        %1552 = vst [vmem:[%s364] sm:$0xff] %v1551
      $region56: #{encoder_forward.3} parent=47 // pred_fallthru
        _
      %p1553 = scmp.lt.s32.totalorder %s22, 0
      %s1554 = scalar_select %p1553, %s22, 0
      %s1555 = smul.addr %s1554, 8
      %s1556 = scalar_lea.vmem %s7, %s1555
      // Predicated region
      $region57: #{encoder_forward.3} parent=47 // pred_check
        %p1557 = pneg %p217
      $region58: #{encoder_forward.3} parent=47 // pred_check_branch
        %1559 = sbr.rel (%p1557) target = $region60
      $region59: #{encoder_forward.3} parent=47 // pred_region
        _
      $region60: #{encoder_forward.3} parent=47 // pred_fallthru
        _
      // Predicated region
      $region61: #{encoder_forward.3} parent=47 // pred_check
        %p1560 = pneg %p217
      $region62: #{encoder_forward.3} parent=47 // pred_check_branch
        %1562 = sbr.rel (%p1560) target = $region64
      $region63: #{encoder_forward.3} parent=47 // pred_region
        %p1563 = scmp.lt.s32.totalorder %s22, 0
        %s1564 = scalar_select %p1563, %s22, 0
        %s1565 = smul.addr %s1564, 8
        %s1566 = scalar_lea.vmem %s7, %s1565
      $region64: #{encoder_forward.3} parent=47 // pred_fallthru
        _
    $region48: #{encoder_forward.3} parent=5 // pred_fallthru
      _
    %p1567 = scmp.le.s32.totalorder 2, %s13
    // Predicated region
    $region65: #{encoder_forward.3} parent=5 // pred_check
      %p1568 = pneg %p1567
    $region66: #{encoder_forward.3} parent=5 // pred_check_branch
      %1570 = sbr.rel (%p1568) target = $region68
    $region67: #{encoder_forward.3} parent=5 // pred_region
      %s1571 = ssub.s32 %s13, 2
    $region68: #{encoder_forward.3} parent=5 // pred_fallthru
      _
  $region6: #{encoder_forward.3} parent=0 // loop_footer
    %s17 = sadd.s32 1, %s13
  $region7: #{encoder_forward.3} parent=0 // loop_footer_branch
    %12 = sbr.rel target = $region3
  $region8: #{encoder_forward.3} parent=0 // loop_exit
    _

</llo_original>
